<compile_context>
chip_gen: v7x
topology: tpu7x:2x2x1
jax: 0.10.0
libtpu: 0.0.40
codegen_flags: <defaults>
</compile_context>

<pallas_src>
import functools

import jax
import jax.numpy as jnp
from jax.experimental import pallas as pl
from jax.experimental.pallas import tpu as pltpu


def _fast_gelu(x):
    # torch_npu.fast_gelu(x) == x * sigmoid(1.702 * x)
    return x * jax.nn.sigmoid(1.702 * x)


def _layernorm(x, gamma, beta, eps=1e-5):
    mean = jnp.mean(x, axis=-1, keepdims=True)
    ctr = x - mean
    var = jnp.mean(ctr * ctr, axis=-1, keepdims=True)
    return ctr * jax.lax.rsqrt(var + eps) * gamma + beta


def _vit_block_kernel(x_ref,
                      wqkv_ref, bqkv_ref,
                      wp_ref, bp_ref,
                      g1_ref, be1_ref, g2_ref, be2_ref,
                      w1_ref, b1_ref, w2_ref, b2_ref,
                      o_ref,
                      attn_ref,                      # VMEM scratch (N_pad, C) bf16
                      *, num_heads, n_valid, compute_dtype, hidden_chunk):
    x = x_ref[0]                                     # (N_pad, C) f32, one image's tokens
    n_tok, dim = x.shape
    head_dim = dim // num_heads
    cd = compute_dtype

    # --- LayerNorm 1 (f32) ---
    xn = _layernorm(x, g1_ref[...], be1_ref[...]).astype(cd)

    # --- fused Q/K/V projection: one (N,C)@(C,3C) matmul, scale already folded into Wq ---
    qkv = jnp.dot(xn, wqkv_ref[...], preferred_element_type=jnp.float32) + bqkv_ref[...]
    qkv = qkv.astype(cd)                             # single f32 -> bf16 cast
    q = qkv[:, 0:dim]
    k = qkv[:, dim:2 * dim]
    v = qkv[:, 2 * dim:3 * dim]

    # --- attention key mask for padded token columns (only when N was padded) ---
    masked = n_valid < n_tok
    if masked:
        key_mask = jax.lax.broadcasted_iota(jnp.int32, (1, n_tok), 1) < n_valid

    # --- multi-head attention; per-head output written to scratch at static columns ---
    for h in range(num_heads):
        lo = h * head_dim
        hi = lo + head_dim
        qh = q[:, lo:hi]
        kh = k[:, lo:hi]
        vh = v[:, lo:hi]
        # scores = (q * scale) @ k.T without materializing a transpose.
        s = jax.lax.dot_general(
            qh, kh,
            dimension_numbers=(((1,), (1,)), ((), ())),
            preferred_element_type=jnp.float32)
        if masked:
            s = jnp.where(key_mask, s, jnp.float32(-1e30))
        # softmax in f32; denominator reciprocal on the EUP
        s = s - jnp.max(s, axis=-1, keepdims=True)
        p = jnp.exp(s)
        p = p * pl.reciprocal(jnp.sum(p, axis=-1, keepdims=True), approx=True)
        oh = jnp.dot(p.astype(cd), vh, preferred_element_type=jnp.float32)
        attn_ref[:, lo:hi] = oh.astype(cd)

    # --- single full-K output projection ---
    y = jnp.dot(attn_ref[...], wp_ref[...],
                preferred_element_type=jnp.float32) + bp_ref[...]

    # --- residual (drop_path == identity in eval) ---
    x1 = x + y

    # --- LayerNorm 2 + MLP (fc1 -> fast_gelu -> fc2), hidden dim processed in chunks ---
    x2n = _layernorm(x1, g2_ref[...], be2_ref[...]).astype(cd)
    hidden = w1_ref.shape[1]
    m = jnp.zeros((n_tok, dim), jnp.float32)
    for c0 in range(0, hidden, hidden_chunk):
        c1 = min(c0 + hidden_chunk, hidden)
        hmid = jnp.dot(x2n, w1_ref[:, c0:c1],
                       preferred_element_type=jnp.float32) + b1_ref[:, c0:c1]
        hmid = _fast_gelu(hmid).astype(cd)
        m = m + jnp.dot(hmid, w2_ref[c0:c1, :], preferred_element_type=jnp.float32)
    m = m + b2_ref[...]

    o_ref[0] = (x1 + m).astype(o_ref.dtype)


def prepare_block_params(params, *, dim, num_heads, qk_scale=None,
                         compute_dtype=jnp.bfloat16):
    """One-time, batch-invariant weight prep (call once, reuse across forwards).

    Transposes nn.Linear weights to (in, out), fuses Q/K/V into a single (C, 3C)
    weight, folds the attention scale into the Q weight/bias, and casts matmul
    operands to the compute dtype.
    """
    (wq, bq, wk, bk, wv, bv, wp, bp,
     g1, be1, g2, be2, w1, b1, w2, b2) = params
    head_dim = dim // num_heads
    scale = qk_scale if qk_scale is not None else head_dim ** (-0.5)
    cd = compute_dtype
    f32 = jnp.float32
    row = lambda a: a.reshape(1, -1).astype(f32)

    wqkv_t = jnp.concatenate([(wq * scale).T, wk.T, wv.T], axis=1).astype(cd)   # (C, 3C)
    bqkv = jnp.concatenate([bq * scale, bk, bv]).reshape(1, -1).astype(f32)     # (1, 3C)
    wp_t = wp.T.astype(cd)
    w1_t = w1.T.astype(cd)
    w2_t = w2.T.astype(cd)

    return (wqkv_t, bqkv, wp_t, row(bp),
            row(g1), row(be1), row(g2), row(be2),
            w1_t, row(b1), w2_t, row(b2))


def vit_block_forward(x, x_shape, prepared, *, num_heads,
                      compute_dtype=jnp.bfloat16, hidden_chunk=1024,
                      vmem_limit_bytes=48 * 1024 * 1024):
    """Run Block.forward(x, x_shape) with a Pallas kernel (grid over the batch).

    x        : (B*N, C) float32 tokens (torch module's flattened layout).
    x_shape  : (B, N, C)
    prepared : output of prepare_block_params().
    """
    B, N, C = x_shape
    assert C % num_heads == 0
    cd = compute_dtype
    f32 = jnp.float32

    # Pad the token dim to a sublane multiple; padded key columns are masked in-kernel.
    n_pad = ((N + 7) // 8) * 8
    x3 = x.reshape(B, N, C).astype(f32)
    if n_pad != N:
        x3 = jnp.pad(x3, ((0, 0), (0, n_pad - N), (0, 0)))

    def const_spec(a):
        return pl.BlockSpec(a.shape, lambda b: (0, 0))

    grid_spec = pltpu.PrefetchScalarGridSpec(
        num_scalar_prefetch=0,
        grid=(B,),
        in_specs=[pl.BlockSpec((1, n_pad, C), lambda b: (b, 0, 0))] +
                 [const_spec(a) for a in prepared],
        out_specs=pl.BlockSpec((1, n_pad, C), lambda b: (b, 0, 0)),
        scratch_shapes=[pltpu.VMEM((n_pad, C), cd)],     # attention output scratch
    )

    kernel = functools.partial(_vit_block_kernel,
                               num_heads=num_heads, n_valid=N,
                               compute_dtype=cd, hidden_chunk=hidden_chunk)

    out = pl.pallas_call(
        kernel,
        out_shape=jax.ShapeDtypeStruct((B, n_pad, C), f32),
        grid_spec=grid_spec,
        compiler_params=pltpu.CompilerParams(
            dimension_semantics=("parallel",),
            vmem_limit_bytes=vmem_limit_bytes),
    )(x3, *prepared)

    if n_pad != N:
        out = out[:, :N, :]
    return out.reshape(B * N, C)


def vit_block_reference(x, x_shape, params, *, num_heads, qk_scale=None,
                        compute_dtype=jnp.bfloat16):
    """Pure-JAX reference using the same matmul compute dtype as the kernel."""
    B, N, C = x_shape
    head_dim = C // num_heads
    scale = qk_scale if qk_scale is not None else head_dim ** (-0.5)
    (wq, bq, wk, bk, wv, bv, wp, bp,
     g1, be1, g2, be2, w1, b1, w2, b2) = params
    cd = compute_dtype

    def lin(a, w, b):
        return jnp.dot(a.astype(cd), w.T.astype(cd),
                       preferred_element_type=jnp.float32) + b

    def ln(v, g, b):
        mu = jnp.mean(v, axis=-1, keepdims=True)
        c = v - mu
        var = jnp.mean(c * c, axis=-1, keepdims=True)
        return c * jax.lax.rsqrt(var + 1e-5) * g + b

    xb = x.reshape(B, N, C).astype(jnp.float32)
    xn = ln(xb, g1, be1)
    q = lin(xn, wq, bq).reshape(B, N, num_heads, head_dim).transpose(0, 2, 1, 3)
    k = lin(xn, wk, bk).reshape(B, N, num_heads, head_dim).transpose(0, 2, 1, 3)
    v = lin(xn, wv, bv).reshape(B, N, num_heads, head_dim).transpose(0, 2, 1, 3)
    s = jnp.einsum('bhnd,bhmd->bhnm', q.astype(cd), k.astype(cd),
                   preferred_element_type=jnp.float32) * scale
    p = jax.nn.softmax(s, axis=-1)
    o = jnp.einsum('bhnm,bhmd->bhnd', p.astype(cd), v.astype(cd),
                   preferred_element_type=jnp.float32)
    o = o.transpose(0, 2, 1, 3).reshape(B, N, C)
    x1 = xb + lin(o, wp, bp)
    x2n = ln(x1, g2, be2)
    m = lin(_fast_gelu(lin(x2n, w1, b1)), w2, b2)
    return (x1 + m).reshape(B * N, C)


def init_block_params(key, dim, num_heads, mlp_ratio=4.0):
    hidden = int(dim * mlp_ratio)
    ks = jax.random.split(key, 14)
    nrm = lambda k, shape, s: s * jax.random.normal(k, shape, dtype=jnp.float32)
    wq = nrm(ks[0], (dim, dim), 0.02); bq = nrm(ks[1], (dim,), 0.01)
    wk = nrm(ks[2], (dim, dim), 0.02); bk = nrm(ks[3], (dim,), 0.01)
    wv = nrm(ks[4], (dim, dim), 0.02); bv = nrm(ks[5], (dim,), 0.01)
    wp = nrm(ks[6], (dim, dim), 0.02); bp = nrm(ks[7], (dim,), 0.01)
    g1 = 1.0 + nrm(ks[8], (dim,), 0.05); be1 = nrm(ks[9], (dim,), 0.05)
    g2 = 1.0 + nrm(ks[10], (dim,), 0.05); be2 = nrm(ks[11], (dim,), 0.05)
    w1 = nrm(ks[12], (hidden, dim), 0.02); b1 = jnp.zeros((hidden,), jnp.float32)
    w2 = nrm(ks[13], (dim, hidden), 0.02); b2 = jnp.zeros((dim,), jnp.float32)
    return (wq, bq, wk, bk, wv, bv, wp, bp, g1, be1, g2, be2, w1, b1, w2, b2)


if __name__ == "__main__":
    num_heads = 4
    mlp_ratio = 4.0
    C = 128

    key = jax.random.PRNGKey(0)
    kx, kx2, kp = jax.random.split(key, 3)
    params = init_block_params(kp, C, num_heads, mlp_ratio)
    prepared = prepare_block_params(params, dim=C, num_heads=num_heads)

    # --- case 1: sublane-aligned token count ---
    B, N = 2, 16
    x = jax.random.normal(kx, (B * N, C), dtype=jnp.float32)
    out = vit_block_forward(x, (B, N, C), prepared, num_heads=num_heads)
    out = jax.block_until_ready(out)
    ref = vit_block_reference(x, (B, N, C), params, num_heads=num_heads)
    assert out.shape == (B * N, C)
    assert jnp.allclose(out, ref, atol=1e-2, rtol=1e-2), "mismatch (aligned N)"

    # --- case 2: non-multiple-of-8 token count (exercises padding + key masking) ---
    B2, N2 = 2, 12
    x2 = jax.random.normal(kx2, (B2 * N2, C), dtype=jnp.float32)
    out2 = vit_block_forward(x2, (B2, N2, C), prepared, num_heads=num_heads)
    out2 = jax.block_until_ready(out2)
    ref2 = vit_block_reference(x2, (B2, N2, C), params, num_heads=num_heads)
    assert out2.shape == (B2 * N2, C)
    assert jnp.allclose(out2, ref2, atol=1e-2, rtol=1e-2), "mismatch (padded N)"

    print("KERNEL_OK")
</pallas_src>

<mosaic_0001>
module attributes {stable_mosaic.version = 11 : i64} {
  func.func @_vit_block_kernel(%arg0: i32, %arg1: memref<1x16x128xf32, #tpu.memory_space<vmem>>, %arg2: memref<128x384xbf16, #tpu.memory_space<vmem>>, %arg3: memref<1x384xf32, #tpu.memory_space<vmem>>, %arg4: memref<128x128xbf16, #tpu.memory_space<vmem>>, %arg5: memref<1x128xf32, #tpu.memory_space<vmem>>, %arg6: memref<1x128xf32, #tpu.memory_space<vmem>>, %arg7: memref<1x128xf32, #tpu.memory_space<vmem>>, %arg8: memref<1x128xf32, #tpu.memory_space<vmem>>, %arg9: memref<1x128xf32, #tpu.memory_space<vmem>>, %arg10: memref<128x512xbf16, #tpu.memory_space<vmem>>, %arg11: memref<1x512xf32, #tpu.memory_space<vmem>>, %arg12: memref<512x128xbf16, #tpu.memory_space<vmem>>, %arg13: memref<1x128xf32, #tpu.memory_space<vmem>>, %arg14: memref<1x16x128xf32, #tpu.memory_space<vmem>>, %arg15: memref<16x128xbf16, #tpu.memory_space<vmem>>) attributes {dimension_semantics = [#tpu.dimension_semantics<parallel>], iteration_bounds = array<i64: 2>, scalar_prefetch = 0 : i64, scratch_operands = 1 : i64, tpu.core_type = #tpu.core_type<tc>, window_params = [{transform_indices = @transform_0, window_bounds = array<i64: 1, 16, 128>}, {pipeline_mode = #tpu.pipeline_mode<synchronous>, transform_indices = @transform_1, window_bounds = array<i64: 128, 384>}, {pipeline_mode = #tpu.pipeline_mode<synchronous>, transform_indices = @transform_2, window_bounds = array<i64: 1, 384>}, {pipeline_mode = #tpu.pipeline_mode<synchronous>, transform_indices = @transform_3, window_bounds = array<i64: 128, 128>}, {pipeline_mode = #tpu.pipeline_mode<synchronous>, transform_indices = @transform_4, window_bounds = array<i64: 1, 128>}, {pipeline_mode = #tpu.pipeline_mode<synchronous>, transform_indices = @transform_5, window_bounds = array<i64: 1, 128>}, {pipeline_mode = #tpu.pipeline_mode<synchronous>, transform_indices = @transform_6, window_bounds = array<i64: 1, 128>}, {pipeline_mode = #tpu.pipeline_mode<synchronous>, transform_indices = @transform_7, window_bounds = array<i64: 1, 128>}, {pipeline_mode = #tpu.pipeline_mode<synchronous>, transform_indices = @transform_8, window_bounds = array<i64: 1, 128>}, {pipeline_mode = #tpu.pipeline_mode<synchronous>, transform_indices = @transform_9, window_bounds = array<i64: 128, 512>}, {pipeline_mode = #tpu.pipeline_mode<synchronous>, transform_indices = @transform_10, window_bounds = array<i64: 1, 512>}, {pipeline_mode = #tpu.pipeline_mode<synchronous>, transform_indices = @transform_11, window_bounds = array<i64: 512, 128>}, {pipeline_mode = #tpu.pipeline_mode<synchronous>, transform_indices = @transform_12, window_bounds = array<i64: 1, 128>}, {transform_indices = @transform_13, window_bounds = array<i64: 1, 16, 128>}]} {
    %c0 = arith.constant 0 : index
    %c0_0 = arith.constant 0 : index
    %c0_1 = arith.constant 0 : index
    %0 = vector.load %arg1[%c0, %c0_0, %c0_1] : memref<1x16x128xf32, #tpu.memory_space<vmem>>, vector<1x16x128xf32>
    %1 = vector.shape_cast %0 : vector<1x16x128xf32> to vector<16x128xf32>
    %c0_2 = arith.constant 0 : index
    %c0_3 = arith.constant 0 : index
    %2 = vector.load %arg6[%c0_2, %c0_3] : memref<1x128xf32, #tpu.memory_space<vmem>>, vector<1x128xf32>
    %c0_4 = arith.constant 0 : index
    %c0_5 = arith.constant 0 : index
    %3 = vector.load %arg7[%c0_4, %c0_5] : memref<1x128xf32, #tpu.memory_space<vmem>>, vector<1x128xf32>
    %cst = arith.constant dense<0.000000e+00> : vector<16xf32>
    %4 = vector.multi_reduction <add>, %1, %cst [1] : vector<16x128xf32> to vector<16xf32>
    %5 = vector.shape_cast %4 : vector<16xf32> to vector<16x1xf32>
    %cst_6 = arith.constant 1.280000e+02 : f32
    %6 = vector.broadcast %cst_6 : f32 to vector<16x1xf32>
    %7 = arith.divf %5, %6 : vector<16x1xf32>
    %8 = vector.broadcast %7 : vector<16x1xf32> to vector<16x128xf32>
    %9 = arith.subf %1, %8 : vector<16x128xf32>
    %10 = arith.mulf %9, %9 : vector<16x128xf32>
    %cst_7 = arith.constant dense<0.000000e+00> : vector<16xf32>
    %11 = vector.multi_reduction <add>, %10, %cst_7 [1] : vector<16x128xf32> to vector<16xf32>
    %12 = vector.shape_cast %11 : vector<16xf32> to vector<16x1xf32>
    %cst_8 = arith.constant 1.280000e+02 : f32
    %13 = vector.broadcast %cst_8 : f32 to vector<16x1xf32>
    %14 = arith.divf %12, %13 : vector<16x1xf32>
    %cst_9 = arith.constant 9.99999974E-6 : f32
    %15 = vector.broadcast %cst_9 : f32 to vector<16x1xf32>
    %16 = arith.addf %14, %15 : vector<16x1xf32>
    %17 = math.rsqrt %16 : vector<16x1xf32>
    %18 = vector.broadcast %17 : vector<16x1xf32> to vector<16x128xf32>
    %19 = arith.mulf %9, %18 : vector<16x128xf32>
    %20 = vector.broadcast %2 : vector<1x128xf32> to vector<16x128xf32>
    %21 = arith.mulf %19, %20 : vector<16x128xf32>
    %22 = vector.broadcast %3 : vector<1x128xf32> to vector<16x128xf32>
    %23 = arith.addf %21, %22 : vector<16x128xf32>
    %24 = arith.truncf %23 : vector<16x128xf32> to vector<16x128xbf16>
    %c0_10 = arith.constant 0 : index
    %c0_11 = arith.constant 0 : index
    %25 = vector.load %arg2[%c0_10, %c0_11] : memref<128x384xbf16, #tpu.memory_space<vmem>>, vector<128x384xbf16>
    %cst_12 = arith.constant dense<0.000000e+00> : vector<16x384xf32>
    %26 = tpu.matmul %24, %25, %cst_12 {dimension_numbers = #tpu.dot_dimension_numbers<[1], [0], [0], [1], [0, 0, 1, 1], [], []>} : vector<16x128xbf16>, vector<128x384xbf16>, vector<16x384xf32> -> vector<16x384xf32>
    %c0_13 = arith.constant 0 : index
    %c0_14 = arith.constant 0 : index
    %27 = vector.load %arg3[%c0_13, %c0_14] : memref<1x384xf32, #tpu.memory_space<vmem>>, vector<1x384xf32>
    %28 = vector.broadcast %27 : vector<1x384xf32> to vector<16x384xf32>
    %29 = arith.addf %26, %28 : vector<16x384xf32>
    %30 = arith.truncf %29 : vector<16x384xf32> to vector<16x384xbf16>
    %31 = vector.extract_strided_slice %30 {offsets = [0, 0], sizes = [16, 128], strides = [1, 1]} : vector<16x384xbf16> to vector<16x128xbf16>
    %32 = vector.extract_strided_slice %30 {offsets = [0, 128], sizes = [16, 128], strides = [1, 1]} : vector<16x384xbf16> to vector<16x128xbf16>
    %33 = vector.extract_strided_slice %30 {offsets = [0, 256], sizes = [16, 128], strides = [1, 1]} : vector<16x384xbf16> to vector<16x128xbf16>
    %34 = vector.extract_strided_slice %31 {offsets = [0, 0], sizes = [16, 32], strides = [1, 1]} : vector<16x128xbf16> to vector<16x32xbf16>
    %35 = vector.extract_strided_slice %32 {offsets = [0, 0], sizes = [16, 32], strides = [1, 1]} : vector<16x128xbf16> to vector<16x32xbf16>
    %36 = vector.extract_strided_slice %33 {offsets = [0, 0], sizes = [16, 32], strides = [1, 1]} : vector<16x128xbf16> to vector<16x32xbf16>
    %cst_15 = arith.constant dense<0.000000e+00> : vector<16x16xf32>
    %37 = tpu.matmul %34, %35, %cst_15 {dimension_numbers = #tpu.dot_dimension_numbers<[1], [1], [0], [0], [0, 0, 1, 0], [], []>} : vector<16x32xbf16>, vector<16x32xbf16>, vector<16x16xf32> -> vector<16x16xf32>
    %cst_16 = arith.constant dense<0xFF800000> : vector<16xf32>
    %38 = vector.multi_reduction <maximumf>, %37, %cst_16 [1] : vector<16x16xf32> to vector<16xf32>
    %39 = vector.shape_cast %38 : vector<16xf32> to vector<16x1xf32>
    %40 = vector.broadcast %39 : vector<16x1xf32> to vector<16x16xf32>
    %41 = arith.subf %37, %40 : vector<16x16xf32>
    %42 = math.exp %41 : vector<16x16xf32>
    %cst_17 = arith.constant dense<0.000000e+00> : vector<16xf32>
    %43 = vector.multi_reduction <add>, %42, %cst_17 [1] : vector<16x16xf32> to vector<16xf32>
    %44 = vector.shape_cast %43 : vector<16xf32> to vector<16x1xf32>
    %45 = tpu.reciprocal %44 {approx = true} : vector<16x1xf32> -> vector<16x1xf32>
    %46 = vector.broadcast %45 : vector<16x1xf32> to vector<16x16xf32>
    %47 = arith.mulf %42, %46 : vector<16x16xf32>
    %48 = arith.truncf %47 : vector<16x16xf32> to vector<16x16xbf16>
    %cst_18 = arith.constant dense<0.000000e+00> : vector<16x32xf32>
    %49 = tpu.matmul %48, %36, %cst_18 {dimension_numbers = #tpu.dot_dimension_numbers<[1], [0], [0], [1], [0, 0, 1, 1], [], []>} : vector<16x16xbf16>, vector<16x32xbf16>, vector<16x32xf32> -> vector<16x32xf32>
    %50 = arith.truncf %49 : vector<16x32xf32> to vector<16x32xbf16>
    %c0_19 = arith.constant 0 : index
    %c0_20 = arith.constant 0 : index
    %51 = vector.load %arg15[%c0_19, %c0_20] : memref<16x128xbf16, #tpu.memory_space<vmem>>, vector<16x32xbf16>
    tpu.vector_store %arg15[%c0_19, %c0_20], %50 {strides = array<i32>} : memref<16x128xbf16, #tpu.memory_space<vmem>>, vector<16x32xbf16>,
    %52 = vector.extract_strided_slice %31 {offsets = [0, 32], sizes = [16, 32], strides = [1, 1]} : vector<16x128xbf16> to vector<16x32xbf16>
    %53 = vector.extract_strided_slice %32 {offsets = [0, 32], sizes = [16, 32], strides = [1, 1]} : vector<16x128xbf16> to vector<16x32xbf16>
    %54 = vector.extract_strided_slice %33 {offsets = [0, 32], sizes = [16, 32], strides = [1, 1]} : vector<16x128xbf16> to vector<16x32xbf16>
    %cst_21 = arith.constant dense<0.000000e+00> : vector<16x16xf32>
    %55 = tpu.matmul %52, %53, %cst_21 {dimension_numbers = #tpu.dot_dimension_numbers<[1], [1], [0], [0], [0, 0, 1, 0], [], []>} : vector<16x32xbf16>, vector<16x32xbf16>, vector<16x16xf32> -> vector<16x16xf32>
    %cst_22 = arith.constant dense<0xFF800000> : vector<16xf32>
    %56 = vector.multi_reduction <maximumf>, %55, %cst_22 [1] : vector<16x16xf32> to vector<16xf32>
    %57 = vector.shape_cast %56 : vector<16xf32> to vector<16x1xf32>
    %58 = vector.broadcast %57 : vector<16x1xf32> to vector<16x16xf32>
    %59 = arith.subf %55, %58 : vector<16x16xf32>
    %60 = math.exp %59 : vector<16x16xf32>
    %cst_23 = arith.constant dense<0.000000e+00> : vector<16xf32>
    %61 = vector.multi_reduction <add>, %60, %cst_23 [1] : vector<16x16xf32> to vector<16xf32>
    %62 = vector.shape_cast %61 : vector<16xf32> to vector<16x1xf32>
    %63 = tpu.reciprocal %62 {approx = true} : vector<16x1xf32> -> vector<16x1xf32>
    %64 = vector.broadcast %63 : vector<16x1xf32> to vector<16x16xf32>
    %65 = arith.mulf %60, %64 : vector<16x16xf32>
    %66 = arith.truncf %65 : vector<16x16xf32> to vector<16x16xbf16>
    %cst_24 = arith.constant dense<0.000000e+00> : vector<16x32xf32>
    %67 = tpu.matmul %66, %54, %cst_24 {dimension_numbers = #tpu.dot_dimension_numbers<[1], [0], [0], [1], [0, 0, 1, 1], [], []>} : vector<16x16xbf16>, vector<16x32xbf16>, vector<16x32xf32> -> vector<16x32xf32>
    %68 = arith.truncf %67 : vector<16x32xf32> to vector<16x32xbf16>
    %c0_25 = arith.constant 0 : index
    %c32 = arith.constant 32 : index
    %69 = vector.load %arg15[%c0_25, %c32] : memref<16x128xbf16, #tpu.memory_space<vmem>>, vector<16x32xbf16>
    tpu.vector_store %arg15[%c0_25, %c32], %68 {strides = array<i32>} : memref<16x128xbf16, #tpu.memory_space<vmem>>, vector<16x32xbf16>,
    %70 = vector.extract_strided_slice %31 {offsets = [0, 64], sizes = [16, 32], strides = [1, 1]} : vector<16x128xbf16> to vector<16x32xbf16>
    %71 = vector.extract_strided_slice %32 {offsets = [0, 64], sizes = [16, 32], strides = [1, 1]} : vector<16x128xbf16> to vector<16x32xbf16>
    %72 = vector.extract_strided_slice %33 {offsets = [0, 64], sizes = [16, 32], strides = [1, 1]} : vector<16x128xbf16> to vector<16x32xbf16>
    %cst_26 = arith.constant dense<0.000000e+00> : vector<16x16xf32>
    %73 = tpu.matmul %70, %71, %cst_26 {dimension_numbers = #tpu.dot_dimension_numbers<[1], [1], [0], [0], [0, 0, 1, 0], [], []>} : vector<16x32xbf16>, vector<16x32xbf16>, vector<16x16xf32> -> vector<16x16xf32>
    %cst_27 = arith.constant dense<0xFF800000> : vector<16xf32>
    %74 = vector.multi_reduction <maximumf>, %73, %cst_27 [1] : vector<16x16xf32> to vector<16xf32>
    %75 = vector.shape_cast %74 : vector<16xf32> to vector<16x1xf32>
    %76 = vector.broadcast %75 : vector<16x1xf32> to vector<16x16xf32>
    %77 = arith.subf %73, %76 : vector<16x16xf32>
    %78 = math.exp %77 : vector<16x16xf32>
    %cst_28 = arith.constant dense<0.000000e+00> : vector<16xf32>
    %79 = vector.multi_reduction <add>, %78, %cst_28 [1] : vector<16x16xf32> to vector<16xf32>
    %80 = vector.shape_cast %79 : vector<16xf32> to vector<16x1xf32>
    %81 = tpu.reciprocal %80 {approx = true} : vector<16x1xf32> -> vector<16x1xf32>
    %82 = vector.broadcast %81 : vector<16x1xf32> to vector<16x16xf32>
    %83 = arith.mulf %78, %82 : vector<16x16xf32>
    %84 = arith.truncf %83 : vector<16x16xf32> to vector<16x16xbf16>
    %cst_29 = arith.constant dense<0.000000e+00> : vector<16x32xf32>
    %85 = tpu.matmul %84, %72, %cst_29 {dimension_numbers = #tpu.dot_dimension_numbers<[1], [0], [0], [1], [0, 0, 1, 1], [], []>} : vector<16x16xbf16>, vector<16x32xbf16>, vector<16x32xf32> -> vector<16x32xf32>
    %86 = arith.truncf %85 : vector<16x32xf32> to vector<16x32xbf16>
    %c0_30 = arith.constant 0 : index
    %c64 = arith.constant 64 : index
    %87 = vector.load %arg15[%c0_30, %c64] : memref<16x128xbf16, #tpu.memory_space<vmem>>, vector<16x32xbf16>
    tpu.vector_store %arg15[%c0_30, %c64], %86 {strides = array<i32>} : memref<16x128xbf16, #tpu.memory_space<vmem>>, vector<16x32xbf16>,
    %88 = vector.extract_strided_slice %31 {offsets = [0, 96], sizes = [16, 32], strides = [1, 1]} : vector<16x128xbf16> to vector<16x32xbf16>
    %89 = vector.extract_strided_slice %32 {offsets = [0, 96], sizes = [16, 32], strides = [1, 1]} : vector<16x128xbf16> to vector<16x32xbf16>
    %90 = vector.extract_strided_slice %33 {offsets = [0, 96], sizes = [16, 32], strides = [1, 1]} : vector<16x128xbf16> to vector<16x32xbf16>
    %cst_31 = arith.constant dense<0.000000e+00> : vector<16x16xf32>
    %91 = tpu.matmul %88, %89, %cst_31 {dimension_numbers = #tpu.dot_dimension_numbers<[1], [1], [0], [0], [0, 0, 1, 0], [], []>} : vector<16x32xbf16>, vector<16x32xbf16>, vector<16x16xf32> -> vector<16x16xf32>
    %cst_32 = arith.constant dense<0xFF800000> : vector<16xf32>
    %92 = vector.multi_reduction <maximumf>, %91, %cst_32 [1] : vector<16x16xf32> to vector<16xf32>
    %93 = vector.shape_cast %92 : vector<16xf32> to vector<16x1xf32>
    %94 = vector.broadcast %93 : vector<16x1xf32> to vector<16x16xf32>
    %95 = arith.subf %91, %94 : vector<16x16xf32>
    %96 = math.exp %95 : vector<16x16xf32>
    %cst_33 = arith.constant dense<0.000000e+00> : vector<16xf32>
    %97 = vector.multi_reduction <add>, %96, %cst_33 [1] : vector<16x16xf32> to vector<16xf32>
    %98 = vector.shape_cast %97 : vector<16xf32> to vector<16x1xf32>
    %99 = tpu.reciprocal %98 {approx = true} : vector<16x1xf32> -> vector<16x1xf32>
    %100 = vector.broadcast %99 : vector<16x1xf32> to vector<16x16xf32>
    %101 = arith.mulf %96, %100 : vector<16x16xf32>
    %102 = arith.truncf %101 : vector<16x16xf32> to vector<16x16xbf16>
    %cst_34 = arith.constant dense<0.000000e+00> : vector<16x32xf32>
    %103 = tpu.matmul %102, %90, %cst_34 {dimension_numbers = #tpu.dot_dimension_numbers<[1], [0], [0], [1], [0, 0, 1, 1], [], []>} : vector<16x16xbf16>, vector<16x32xbf16>, vector<16x32xf32> -> vector<16x32xf32>
    %104 = arith.truncf %103 : vector<16x32xf32> to vector<16x32xbf16>
    %c0_35 = arith.constant 0 : index
    %c96 = arith.constant 96 : index
    %105 = vector.load %arg15[%c0_35, %c96] : memref<16x128xbf16, #tpu.memory_space<vmem>>, vector<16x32xbf16>
    tpu.vector_store %arg15[%c0_35, %c96], %104 {strides = array<i32>} : memref<16x128xbf16, #tpu.memory_space<vmem>>, vector<16x32xbf16>,
    %c0_36 = arith.constant 0 : index
    %c0_37 = arith.constant 0 : index
    %106 = vector.load %arg15[%c0_36, %c0_37] : memref<16x128xbf16, #tpu.memory_space<vmem>>, vector<16x128xbf16>
    %c0_38 = arith.constant 0 : index
    %c0_39 = arith.constant 0 : index
    %107 = vector.load %arg4[%c0_38, %c0_39] : memref<128x128xbf16, #tpu.memory_space<vmem>>, vector<128x128xbf16>
    %cst_40 = arith.constant dense<0.000000e+00> : vector<16x128xf32>
    %108 = tpu.matmul %106, %107, %cst_40 {dimension_numbers = #tpu.dot_dimension_numbers<[1], [0], [0], [1], [0, 0, 1, 1], [], []>} : vector<16x128xbf16>, vector<128x128xbf16>, vector<16x128xf32> -> vector<16x128xf32>
    %c0_41 = arith.constant 0 : index
    %c0_42 = arith.constant 0 : index
    %109 = vector.load %arg5[%c0_41, %c0_42] : memref<1x128xf32, #tpu.memory_space<vmem>>, vector<1x128xf32>
    %110 = vector.broadcast %109 : vector<1x128xf32> to vector<16x128xf32>
    %111 = arith.addf %108, %110 : vector<16x128xf32>
    %112 = arith.addf %1, %111 : vector<16x128xf32>
    %c0_43 = arith.constant 0 : index
    %c0_44 = arith.constant 0 : index
    %113 = vector.load %arg8[%c0_43, %c0_44] : memref<1x128xf32, #tpu.memory_space<vmem>>, vector<1x128xf32>
    %c0_45 = arith.constant 0 : index
    %c0_46 = arith.constant 0 : index
    %114 = vector.load %arg9[%c0_45, %c0_46] : memref<1x128xf32, #tpu.memory_space<vmem>>, vector<1x128xf32>
    %cst_47 = arith.constant dense<0.000000e+00> : vector<16xf32>
    %115 = vector.multi_reduction <add>, %112, %cst_47 [1] : vector<16x128xf32> to vector<16xf32>
    %116 = vector.shape_cast %115 : vector<16xf32> to vector<16x1xf32>
    %cst_48 = arith.constant 1.280000e+02 : f32
    %117 = vector.broadcast %cst_48 : f32 to vector<16x1xf32>
    %118 = arith.divf %116, %117 : vector<16x1xf32>
    %119 = vector.broadcast %118 : vector<16x1xf32> to vector<16x128xf32>
    %120 = arith.subf %112, %119 : vector<16x128xf32>
    %121 = arith.mulf %120, %120 : vector<16x128xf32>
    %cst_49 = arith.constant dense<0.000000e+00> : vector<16xf32>
    %122 = vector.multi_reduction <add>, %121, %cst_49 [1] : vector<16x128xf32> to vector<16xf32>
    %123 = vector.shape_cast %122 : vector<16xf32> to vector<16x1xf32>
    %cst_50 = arith.constant 1.280000e+02 : f32
    %124 = vector.broadcast %cst_50 : f32 to vector<16x1xf32>
    %125 = arith.divf %123, %124 : vector<16x1xf32>
    %cst_51 = arith.constant 9.99999974E-6 : f32
    %126 = vector.broadcast %cst_51 : f32 to vector<16x1xf32>
    %127 = arith.addf %125, %126 : vector<16x1xf32>
    %128 = math.rsqrt %127 : vector<16x1xf32>
    %129 = vector.broadcast %128 : vector<16x1xf32> to vector<16x128xf32>
    %130 = arith.mulf %120, %129 : vector<16x128xf32>
    %131 = vector.broadcast %113 : vector<1x128xf32> to vector<16x128xf32>
    %132 = arith.mulf %130, %131 : vector<16x128xf32>
    %133 = vector.broadcast %114 : vector<1x128xf32> to vector<16x128xf32>
    %134 = arith.addf %132, %133 : vector<16x128xf32>
    %135 = arith.truncf %134 : vector<16x128xf32> to vector<16x128xbf16>
    %cst_52 = arith.constant 0.000000e+00 : f32
    %136 = vector.broadcast %cst_52 : f32 to vector<16x128xf32>
    %c0_53 = arith.constant 0 : index
    %c0_54 = arith.constant 0 : index
    %137 = vector.load %arg10[%c0_53, %c0_54] : memref<128x512xbf16, #tpu.memory_space<vmem>>, vector<128x512xbf16>
    %cst_55 = arith.constant dense<0.000000e+00> : vector<16x512xf32>
    %138 = tpu.matmul %135, %137, %cst_55 {dimension_numbers = #tpu.dot_dimension_numbers<[1], [0], [0], [1], [0, 0, 1, 1], [], []>} : vector<16x128xbf16>, vector<128x512xbf16>, vector<16x512xf32> -> vector<16x512xf32>
    %c0_56 = arith.constant 0 : index
    %c0_57 = arith.constant 0 : index
    %139 = vector.load %arg11[%c0_56, %c0_57] : memref<1x512xf32, #tpu.memory_space<vmem>>, vector<1x512xf32>
    %140 = vector.broadcast %139 : vector<1x512xf32> to vector<16x512xf32>
    %141 = arith.addf %138, %140 : vector<16x512xf32>
    %cst_58 = arith.constant 1.702000e+00 : f32
    %142 = vector.broadcast %cst_58 : f32 to vector<16x512xf32>
    %143 = arith.mulf %142, %141 : vector<16x512xf32>
    %144 = arith.negf %143 : vector<16x512xf32>
    %145 = math.exp %144 : vector<16x512xf32>
    %cst_59 = arith.constant 1.000000e+00 : f32
    %146 = vector.broadcast %cst_59 : f32 to vector<16x512xf32>
    %147 = arith.addf %146, %145 : vector<16x512xf32>
    %148 = arith.divf %146, %147 : vector<16x512xf32>
    %149 = arith.mulf %141, %148 : vector<16x512xf32>
    %150 = arith.truncf %149 : vector<16x512xf32> to vector<16x512xbf16>
    %c0_60 = arith.constant 0 : index
    %c0_61 = arith.constant 0 : index
    %151 = vector.load %arg12[%c0_60, %c0_61] : memref<512x128xbf16, #tpu.memory_space<vmem>>, vector<512x128xbf16>
    %cst_62 = arith.constant dense<0.000000e+00> : vector<16x128xf32>
    %152 = tpu.matmul %150, %151, %cst_62 {dimension_numbers = #tpu.dot_dimension_numbers<[1], [0], [0], [1], [0, 0, 1, 1], [], []>} : vector<16x512xbf16>, vector<512x128xbf16>, vector<16x128xf32> -> vector<16x128xf32>
    %153 = arith.addf %136, %152 : vector<16x128xf32>
    %c0_63 = arith.constant 0 : index
    %c0_64 = arith.constant 0 : index
    %154 = vector.load %arg13[%c0_63, %c0_64] : memref<1x128xf32, #tpu.memory_space<vmem>>, vector<1x128xf32>
    %155 = vector.broadcast %154 : vector<1x128xf32> to vector<16x128xf32>
    %156 = arith.addf %153, %155 : vector<16x128xf32>
    %157 = arith.addf %112, %156 : vector<16x128xf32>
    %c0_65 = arith.constant 0 : index
    %c0_66 = arith.constant 0 : index
    %c0_67 = arith.constant 0 : index
    %158 = vector.load %arg14[%c0_65, %c0_66, %c0_67] : memref<1x16x128xf32, #tpu.memory_space<vmem>>, vector<1x16x128xf32>
    %159 = vector.shape_cast %158 : vector<1x16x128xf32> to vector<16x128xf32>
    %160 = vector.shape_cast %157 : vector<16x128xf32> to vector<1x16x128xf32>
    tpu.vector_store %arg14[%c0_65, %c0_66, %c0_67], %160 {strides = array<i32>} : memref<1x16x128xf32, #tpu.memory_space<vmem>>, vector<1x16x128xf32>,
    return
  }
  func.func @transform_0(%arg0: i32) -> (i32, i32, i32) {
    %c0_i32 = arith.constant 0 : i32
    %c0_i32_0 = arith.constant 0 : i32
    %c0_i32_1 = arith.constant 0 : i32
    return %arg0, %c0_i32, %c0_i32_0 : i32, i32, i32
  }
  func.func @transform_1(%arg0: i32) -> (i32, i32) {
    %c0_i32 = arith.constant 0 : i32
    %c0_i32_0 = arith.constant 0 : i32
    %c0_i32_1 = arith.constant 0 : i32
    return %c0_i32, %c0_i32_0 : i32, i32
  }
  func.func @transform_2(%arg0: i32) -> (i32, i32) {
    %c0_i32 = arith.constant 0 : i32
    %c0_i32_0 = arith.constant 0 : i32
    %c0_i32_1 = arith.constant 0 : i32
    return %c0_i32, %c0_i32_0 : i32, i32
  }
  func.func @transform_3(%arg0: i32) -> (i32, i32) {
    %c0_i32 = arith.constant 0 : i32
    %c0_i32_0 = arith.constant 0 : i32
    %c0_i32_1 = arith.constant 0 : i32
    return %c0_i32, %c0_i32_0 : i32, i32
  }
  func.func @transform_4(%arg0: i32) -> (i32, i32) {
    %c0_i32 = arith.constant 0 : i32
    %c0_i32_0 = arith.constant 0 : i32
    %c0_i32_1 = arith.constant 0 : i32
    return %c0_i32, %c0_i32_0 : i32, i32
  }
  func.func @transform_5(%arg0: i32) -> (i32, i32) {
    %c0_i32 = arith.constant 0 : i32
    %c0_i32_0 = arith.constant 0 : i32
    %c0_i32_1 = arith.constant 0 : i32
    return %c0_i32, %c0_i32_0 : i32, i32
  }
  func.func @transform_6(%arg0: i32) -> (i32, i32) {
    %c0_i32 = arith.constant 0 : i32
    %c0_i32_0 = arith.constant 0 : i32
    %c0_i32_1 = arith.constant 0 : i32
    return %c0_i32, %c0_i32_0 : i32, i32
  }
  func.func @transform_7(%arg0: i32) -> (i32, i32) {
    %c0_i32 = arith.constant 0 : i32
    %c0_i32_0 = arith.constant 0 : i32
    %c0_i32_1 = arith.constant 0 : i32
    return %c0_i32, %c0_i32_0 : i32, i32
  }
  func.func @transform_8(%arg0: i32) -> (i32, i32) {
    %c0_i32 = arith.constant 0 : i32
    %c0_i32_0 = arith.constant 0 : i32
    %c0_i32_1 = arith.constant 0 : i32
    return %c0_i32, %c0_i32_0 : i32, i32
  }
  func.func @transform_9(%arg0: i32) -> (i32, i32) {
    %c0_i32 = arith.constant 0 : i32
    %c0_i32_0 = arith.constant 0 : i32
    %c0_i32_1 = arith.constant 0 : i32
    return %c0_i32, %c0_i32_0 : i32, i32
  }
  func.func @transform_10(%arg0: i32) -> (i32, i32) {
    %c0_i32 = arith.constant 0 : i32
    %c0_i32_0 = arith.constant 0 : i32
    %c0_i32_1 = arith.constant 0 : i32
    return %c0_i32, %c0_i32_0 : i32, i32
  }
  func.func @transform_11(%arg0: i32) -> (i32, i32) {
    %c0_i32 = arith.constant 0 : i32
    %c0_i32_0 = arith.constant 0 : i32
    %c0_i32_1 = arith.constant 0 : i32
    return %c0_i32, %c0_i32_0 : i32, i32
  }
  func.func @transform_12(%arg0: i32) -> (i32, i32) {
    %c0_i32 = arith.constant 0 : i32
    %c0_i32_0 = arith.constant 0 : i32
    %c0_i32_1 = arith.constant 0 : i32
    return %c0_i32, %c0_i32_0 : i32, i32
  }
  func.func @transform_13(%arg0: i32) -> (i32, i32, i32) {
    %c0_i32 = arith.constant 0 : i32
    %c0_i32_0 = arith.constant 0 : i32
    %c0_i32_1 = arith.constant 0 : i32
    return %arg0, %c0_i32, %c0_i32_0 : i32, i32, i32
  }
}

</mosaic_0001>

<llo_original>
// kernel: tpu_custom_call.1
$region0: #{tpu_custom_call.1}
  #allocation0 [shape = 'u32[]', space=smem, size = 0x4, offset = 0x4, fixed_abs, tag = 'smem constant byte address 0x4 - core index']
  #allocation1 [shape = 'u32[144,128]{1,0:T(1,128)}', space=vmem, size = 0x12000, scoped, tag = 'internal scratch']
  #allocation2 [shape = 'bf16[16,128]{1,0:T(16,128)(2,1)}', space=vmem, size = 0x1000, scoped, tag = 'scratch operand']
  %s0 = inlined_call_operand.hbm [shape: f32[2,16,128], index: 0, kind: input, shape index: {}]
  %s1 = inlined_call_operand.hbm [shape: bf16[128,384], index: 1, kind: input, shape index: {}]
  %s2 = inlined_call_operand.vmem [shape: f32[1,384], index: 2, kind: input, shape index: {}]
  %s3 = inlined_call_operand.hbm [shape: bf16[128,128], index: 3, kind: input, shape index: {}]
  %s4 = inlined_call_operand.vmem [shape: f32[1,128], index: 4, kind: input, shape index: {}]
  %s5 = inlined_call_operand.vmem [shape: f32[1,128], index: 5, kind: input, shape index: {}]
  %s6 = inlined_call_operand.vmem [shape: f32[1,128], index: 6, kind: input, shape index: {}]
  %s7 = inlined_call_operand.vmem [shape: f32[1,128], index: 7, kind: input, shape index: {}]
  %s8 = inlined_call_operand.vmem [shape: f32[1,128], index: 8, kind: input, shape index: {}]
  %s9 = inlined_call_operand.hbm [shape: bf16[128,512], index: 9, kind: input, shape index: {}]
  %s10 = inlined_call_operand.vmem [shape: f32[1,512], index: 10, kind: input, shape index: {}]
  %s11 = inlined_call_operand.hbm [shape: bf16[512,128], index: 11, kind: input, shape index: {}]
  %s12 = inlined_call_operand.vmem [shape: f32[1,128], index: 12, kind: input, shape index: {}]
  %s13 = inlined_call_operand.hbm [shape: f32[2,16,128], index: 13, kind: output, shape index: {}]
  %s14 = sld [smem:[#allocation0]]
  $region105: #{tpu_custom_call.1} parent=0
    _
  %s16 = ssub.s32 1, %s14
  %s17 = scalar_select 0, %s16, %s14
  $region1: #{tpu_custom_call.1} parent=0
    #allocation3 [shape = 'u8[16384]{0}', space=vmem, size = 0x4000, scoped, tag = 'input window, operand 0']
    #allocation4 [shape = 's32[2]{0}', space=sflag, size = 0x8, scoped, tag = 'scoped memory for tpu_custom_call.1']
    #allocation5 [shape = 's32[2]{0}', space=sflag, size = 0x8, scoped, tag = 'scoped memory for tpu_custom_call.1']
    #allocation6 [shape = 'u8[98304]{0}', space=vmem, size = 0x18000, scoped, tag = 'input window, operand 1, single buffered']
    #allocation7 [shape = 's32[1]{0}', space=sflag, size = 0x4, scoped, tag = 'scoped memory for tpu_custom_call.1']
    #allocation8 [shape = 'u8[32768]{0}', space=vmem, size = 0x8000, scoped, tag = 'input window, operand 3, single buffered']
    #allocation9 [shape = 'u8[131072]{0}', space=vmem, size = 0x20000, scoped, tag = 'input window, operand 9, single buffered']
    #allocation10 [shape = 's32[1]{0}', space=sflag, size = 0x4, scoped, tag = 'scoped memory for tpu_custom_call.1']
    #allocation11 [shape = 'u8[131072]{0}', space=vmem, size = 0x20000, scoped, tag = 'input window, operand 11, single buffered']
    #allocation12 [shape = 'u8[16384]{0}', space=vmem, size = 0x4000, scoped, tag = 'output window, operand 0']
    %18 = vsyncpa [#allocation4], 0
    %s19 = scalar_lea.sflag [#allocation4], 1
    %20 = vsyncpa %s19, 0
    %21 = vsyncpa [#allocation7], 0
    %22 = vsyncpa [#allocation10], 0
    %23 = vsyncpa [#allocation5], 0
    %s24 = scalar_lea.sflag [#allocation5], 1
    %25 = vsyncpa %s24, 0
    loop: start=0, step=1, limit=4
    $region2: #{tpu_custom_call.1} parent=1 // loop_pre_header
      _
    $region3: #{tpu_custom_call.1} parent=1 // loop_header
      %s27 = sphi 0, %s31
      %p28 = scmp.ge.s32.totalorder %s27, 4
      %s37 = sphi 0, %s39
      %s40 = sphi 0, %s37
      %s41 = sphi 0, %s40
      %s57 = sphi 0, %s41
      %s61 = sphi 0, %s61
      %s63 = sphi 0, %s61
      %s64 = sphi 0, %s63
      %s78 = sphi 0, %s64
      %s82 = sphi 0, %s82
      %s84 = sphi 0, %s82
      %s85 = sphi 0, %s84
      %s99 = sphi 0, %s85
      %s103 = sphi 0, %s103
      %s105 = sphi 0, %s103
      %s106 = sphi 0, %s105
      %s120 = sphi 0, %s106
      %s124 = sphi 0, %s124
      %s126 = sphi 0, %s124
      %s127 = sphi 0, %s126
      %s141 = sphi 0, %s127
      %s145 = sphi 0, %s145
      %s147 = sphi 0, %s145
      %s148 = sphi 0, %s147
      %s162 = sphi 0, %s148
      %s166 = sphi 0, %s166
      %s168 = sphi 0, %s166
      %s169 = sphi 0, %s168
      %s183 = sphi 0, %s169
      %s187 = sphi 0, %s187
      %s189 = sphi 0, %s187
      %s190 = sphi 0, %s189
      %s204 = sphi 0, %s190
      %s208 = sphi 0, %s208
      %s210 = sphi 0, %s208
      %s211 = sphi 0, %s210
      %s225 = sphi 0, %s211
      %s229 = sphi 0, %s229
      %s231 = sphi 0, %s229
      %s232 = sphi 0, %s231
      %s246 = sphi 0, %s232
      %s250 = sphi 0, %s250
      %s252 = sphi 0, %s250
      %s253 = sphi 0, %s252
      %s267 = sphi 0, %s253
      %s271 = sphi 0, %s271
      %s273 = sphi 0, %s271
      %s274 = sphi 0, %s273
      %s288 = sphi 0, %s274
      %s292 = sphi 0, %s292
      %s294 = sphi 0, %s292
      %s295 = sphi 0, %s294
      %s309 = sphi 0, %s295
      %s315 = sphi 0, %s317
      %s318 = sphi 0, %s315
      %s319 = sphi 0, %s318
      %s335 = sphi 0, %s319
    $region4: #{tpu_custom_call.1} parent=1 // loop_header_branch
      %30 = sbr.rel (%p28) target = $region8
    $region5: #{tpu_custom_call.1} parent=1 // loop_body
      %s32 = ssub.s32 %s27, 1
      %s33 = ssub.s32 %s27, 2
      %s34 = sadd.s32 %s27, 1
      %s35 = ssub.s32 %s27, %s34
      %p36 = scmp.eq.s32.totalorder %s35, 0
      %s38 = sadd.s32 %s37, 1
      %s39 = scalar_select %p36, %s37, %s38
      %p42 = pneg %p36
      %p43 = scmp.eq.s32.totalorder %s27, 1
      %p44 = por %p42, %p43
      %p45 = scmp.ne.s32.totalorder %s37, %s40
      %p46 = scmp.eq.s32.totalorder %s27, 0
      %p47 = por %p45, %p46
      %p48 = scmp.ne.s32.totalorder %s37, %s40
      %p49 = scmp.eq.s32.totalorder %s32, 1
      %p50 = por %p48, %p49
      %p51 = scmp.ne.s32.totalorder %s40, %s41
      %p52 = scmp.eq.s32.totalorder %s32, 0
      %p53 = por %p51, %p52
      %p54 = scmp.ne.s32.totalorder %s40, %s41
      %p55 = scmp.eq.s32.totalorder %s33, 1
      %p56 = por %p54, %p55
      %p58 = scmp.ne.s32.totalorder %s41, %s57
      %p59 = scmp.eq.s32.totalorder %s33, 0
      %p60 = por %p58, %p59
      %s62 = sadd.s32 %s61, 1
      %p65 = scmp.eq.s32.totalorder %s27, 1
      %p66 = scmp.ne.s32.totalorder %s61, %s63
      %p67 = scmp.eq.s32.totalorder %s27, 0
      %p68 = por %p66, %p67
      %p69 = scmp.ne.s32.totalorder %s61, %s63
      %p70 = scmp.eq.s32.totalorder %s32, 1
      %p71 = por %p69, %p70
      %p72 = scmp.ne.s32.totalorder %s63, %s64
      %p73 = scmp.eq.s32.totalorder %s32, 0
      %p74 = por %p72, %p73
      %p75 = scmp.ne.s32.totalorder %s63, %s64
      %p76 = scmp.eq.s32.totalorder %s33, 1
      %p77 = por %p75, %p76
      %p79 = scmp.ne.s32.totalorder %s64, %s78
      %p80 = scmp.eq.s32.totalorder %s33, 0
      %p81 = por %p79, %p80
      %s83 = sadd.s32 %s82, 1
      %p86 = scmp.eq.s32.totalorder %s27, 1
      %p87 = scmp.ne.s32.totalorder %s82, %s84
      %p88 = scmp.eq.s32.totalorder %s27, 0
      %p89 = por %p87, %p88
      %p90 = scmp.ne.s32.totalorder %s82, %s84
      %p91 = scmp.eq.s32.totalorder %s32, 1
      %p92 = por %p90, %p91
      %p93 = scmp.ne.s32.totalorder %s84, %s85
      %p94 = scmp.eq.s32.totalorder %s32, 0
      %p95 = por %p93, %p94
      %p96 = scmp.ne.s32.totalorder %s84, %s85
      %p97 = scmp.eq.s32.totalorder %s33, 1
      %p98 = por %p96, %p97
      %p100 = scmp.ne.s32.totalorder %s85, %s99
      %p101 = scmp.eq.s32.totalorder %s33, 0
      %p102 = por %p100, %p101
      %s104 = sadd.s32 %s103, 1
      %p107 = scmp.eq.s32.totalorder %s27, 1
      %p108 = scmp.ne.s32.totalorder %s103, %s105
      %p109 = scmp.eq.s32.totalorder %s27, 0
      %p110 = por %p108, %p109
      %p111 = scmp.ne.s32.totalorder %s103, %s105
      %p112 = scmp.eq.s32.totalorder %s32, 1
      %p113 = por %p111, %p112
      %p114 = scmp.ne.s32.totalorder %s105, %s106
      %p115 = scmp.eq.s32.totalorder %s32, 0
      %p116 = por %p114, %p115
      %p117 = scmp.ne.s32.totalorder %s105, %s106
      %p118 = scmp.eq.s32.totalorder %s33, 1
      %p119 = por %p117, %p118
      %p121 = scmp.ne.s32.totalorder %s106, %s120
      %p122 = scmp.eq.s32.totalorder %s33, 0
      %p123 = por %p121, %p122
      %s125 = sadd.s32 %s124, 1
      %p128 = scmp.eq.s32.totalorder %s27, 1
      %p129 = scmp.ne.s32.totalorder %s124, %s126
      %p130 = scmp.eq.s32.totalorder %s27, 0
      %p131 = por %p129, %p130
      %p132 = scmp.ne.s32.totalorder %s124, %s126
      %p133 = scmp.eq.s32.totalorder %s32, 1
      %p134 = por %p132, %p133
      %p135 = scmp.ne.s32.totalorder %s126, %s127
      %p136 = scmp.eq.s32.totalorder %s32, 0
      %p137 = por %p135, %p136
      %p138 = scmp.ne.s32.totalorder %s126, %s127
      %p139 = scmp.eq.s32.totalorder %s33, 1
      %p140 = por %p138, %p139
      %p142 = scmp.ne.s32.totalorder %s127, %s141
      %p143 = scmp.eq.s32.totalorder %s33, 0
      %p144 = por %p142, %p143
      %s146 = sadd.s32 %s145, 1
      %p149 = scmp.eq.s32.totalorder %s27, 1
      %p150 = scmp.ne.s32.totalorder %s145, %s147
      %p151 = scmp.eq.s32.totalorder %s27, 0
      %p152 = por %p150, %p151
      %p153 = scmp.ne.s32.totalorder %s145, %s147
      %p154 = scmp.eq.s32.totalorder %s32, 1
      %p155 = por %p153, %p154
      %p156 = scmp.ne.s32.totalorder %s147, %s148
      %p157 = scmp.eq.s32.totalorder %s32, 0
      %p158 = por %p156, %p157
      %p159 = scmp.ne.s32.totalorder %s147, %s148
      %p160 = scmp.eq.s32.totalorder %s33, 1
      %p161 = por %p159, %p160
      %p163 = scmp.ne.s32.totalorder %s148, %s162
      %p164 = scmp.eq.s32.totalorder %s33, 0
      %p165 = por %p163, %p164
      %s167 = sadd.s32 %s166, 1
      %p170 = scmp.eq.s32.totalorder %s27, 1
      %p171 = scmp.ne.s32.totalorder %s166, %s168
      %p172 = scmp.eq.s32.totalorder %s27, 0
      %p173 = por %p171, %p172
      %p174 = scmp.ne.s32.totalorder %s166, %s168
      %p175 = scmp.eq.s32.totalorder %s32, 1
      %p176 = por %p174, %p175
      %p177 = scmp.ne.s32.totalorder %s168, %s169
      %p178 = scmp.eq.s32.totalorder %s32, 0
      %p179 = por %p177, %p178
      %p180 = scmp.ne.s32.totalorder %s168, %s169
      %p181 = scmp.eq.s32.totalorder %s33, 1
      %p182 = por %p180, %p181
      %p184 = scmp.ne.s32.totalorder %s169, %s183
      %p185 = scmp.eq.s32.totalorder %s33, 0
      %p186 = por %p184, %p185
      %s188 = sadd.s32 %s187, 1
      %p191 = scmp.eq.s32.totalorder %s27, 1
      %p192 = scmp.ne.s32.totalorder %s187, %s189
      %p193 = scmp.eq.s32.totalorder %s27, 0
      %p194 = por %p192, %p193
      %p195 = scmp.ne.s32.totalorder %s187, %s189
      %p196 = scmp.eq.s32.totalorder %s32, 1
      %p197 = por %p195, %p196
      %p198 = scmp.ne.s32.totalorder %s189, %s190
      %p199 = scmp.eq.s32.totalorder %s32, 0
      %p200 = por %p198, %p199
      %p201 = scmp.ne.s32.totalorder %s189, %s190
      %p202 = scmp.eq.s32.totalorder %s33, 1
      %p203 = por %p201, %p202
      %p205 = scmp.ne.s32.totalorder %s190, %s204
      %p206 = scmp.eq.s32.totalorder %s33, 0
      %p207 = por %p205, %p206
      %s209 = sadd.s32 %s208, 1
      %p212 = scmp.eq.s32.totalorder %s27, 1
      %p213 = scmp.ne.s32.totalorder %s208, %s210
      %p214 = scmp.eq.s32.totalorder %s27, 0
      %p215 = por %p213, %p214
      %p216 = scmp.ne.s32.totalorder %s208, %s210
      %p217 = scmp.eq.s32.totalorder %s32, 1
      %p218 = por %p216, %p217
      %p219 = scmp.ne.s32.totalorder %s210, %s211
      %p220 = scmp.eq.s32.totalorder %s32, 0
      %p221 = por %p219, %p220
      %p222 = scmp.ne.s32.totalorder %s210, %s211
      %p223 = scmp.eq.s32.totalorder %s33, 1
      %p224 = por %p222, %p223
      %p226 = scmp.ne.s32.totalorder %s211, %s225
      %p227 = scmp.eq.s32.totalorder %s33, 0
      %p228 = por %p226, %p227
      %s230 = sadd.s32 %s229, 1
      %p233 = scmp.eq.s32.totalorder %s27, 1
      %p234 = scmp.ne.s32.totalorder %s229, %s231
      %p235 = scmp.eq.s32.totalorder %s27, 0
      %p236 = por %p234, %p235
      %p237 = scmp.ne.s32.totalorder %s229, %s231
      %p238 = scmp.eq.s32.totalorder %s32, 1
      %p239 = por %p237, %p238
      %p240 = scmp.ne.s32.totalorder %s231, %s232
      %p241 = scmp.eq.s32.totalorder %s32, 0
      %p242 = por %p240, %p241
      %p243 = scmp.ne.s32.totalorder %s231, %s232
      %p244 = scmp.eq.s32.totalorder %s33, 1
      %p245 = por %p243, %p244
      %p247 = scmp.ne.s32.totalorder %s232, %s246
      %p248 = scmp.eq.s32.totalorder %s33, 0
      %p249 = por %p247, %p248
      %s251 = sadd.s32 %s250, 1
      %p254 = scmp.eq.s32.totalorder %s27, 1
      %p255 = scmp.ne.s32.totalorder %s250, %s252
      %p256 = scmp.eq.s32.totalorder %s27, 0
      %p257 = por %p255, %p256
      %p258 = scmp.ne.s32.totalorder %s250, %s252
      %p259 = scmp.eq.s32.totalorder %s32, 1
      %p260 = por %p258, %p259
      %p261 = scmp.ne.s32.totalorder %s252, %s253
      %p262 = scmp.eq.s32.totalorder %s32, 0
      %p263 = por %p261, %p262
      %p264 = scmp.ne.s32.totalorder %s252, %s253
      %p265 = scmp.eq.s32.totalorder %s33, 1
      %p266 = por %p264, %p265
      %p268 = scmp.ne.s32.totalorder %s253, %s267
      %p269 = scmp.eq.s32.totalorder %s33, 0
      %p270 = por %p268, %p269
      %s272 = sadd.s32 %s271, 1
      %p275 = scmp.eq.s32.totalorder %s27, 1
      %p276 = scmp.ne.s32.totalorder %s271, %s273
      %p277 = scmp.eq.s32.totalorder %s27, 0
      %p278 = por %p276, %p277
      %p279 = scmp.ne.s32.totalorder %s271, %s273
      %p280 = scmp.eq.s32.totalorder %s32, 1
      %p281 = por %p279, %p280
      %p282 = scmp.ne.s32.totalorder %s273, %s274
      %p283 = scmp.eq.s32.totalorder %s32, 0
      %p284 = por %p282, %p283
      %p285 = scmp.ne.s32.totalorder %s273, %s274
      %p286 = scmp.eq.s32.totalorder %s33, 1
      %p287 = por %p285, %p286
      %p289 = scmp.ne.s32.totalorder %s274, %s288
      %p290 = scmp.eq.s32.totalorder %s33, 0
      %p291 = por %p289, %p290
      %s293 = sadd.s32 %s292, 1
      %p296 = scmp.eq.s32.totalorder %s27, 1
      %p297 = scmp.ne.s32.totalorder %s292, %s294
      %p298 = scmp.eq.s32.totalorder %s27, 0
      %p299 = por %p297, %p298
      %p300 = scmp.ne.s32.totalorder %s292, %s294
      %p301 = scmp.eq.s32.totalorder %s32, 1
      %p302 = por %p300, %p301
      %p303 = scmp.ne.s32.totalorder %s294, %s295
      %p304 = scmp.eq.s32.totalorder %s32, 0
      %p305 = por %p303, %p304
      %p306 = scmp.ne.s32.totalorder %s294, %s295
      %p307 = scmp.eq.s32.totalorder %s33, 1
      %p308 = por %p306, %p307
      %p310 = scmp.ne.s32.totalorder %s295, %s309
      %p311 = scmp.eq.s32.totalorder %s33, 0
      %p312 = por %p310, %p311
      %s313 = ssub.s32 %s27, %s34
      %p314 = scmp.eq.s32.totalorder %s313, 0
      %s316 = sadd.s32 %s315, 1
      %s317 = scalar_select %p314, %s315, %s316
      %p320 = pneg %p314
      %p321 = scmp.eq.s32.totalorder %s27, 1
      %p322 = por %p320, %p321
      %p323 = scmp.ne.s32.totalorder %s315, %s318
      %p324 = scmp.eq.s32.totalorder %s27, 0
      %p325 = por %p323, %p324
      %p326 = scmp.ne.s32.totalorder %s315, %s318
      %p327 = scmp.eq.s32.totalorder %s32, 1
      %p328 = por %p326, %p327
      %p329 = scmp.ne.s32.totalorder %s318, %s319
      %p330 = scmp.eq.s32.totalorder %s32, 0
      %p331 = por %p329, %p330
      %p332 = scmp.ne.s32.totalorder %s318, %s319
      %p333 = scmp.eq.s32.totalorder %s33, 1
      %p334 = por %p332, %p333
      %p336 = scmp.ne.s32.totalorder %s319, %s335
      %p337 = scmp.eq.s32.totalorder %s33, 0
      %p338 = por %p336, %p337
      %p339 = scmp.le.s32.totalorder 1, %s27
      %p340 = scmp.lt.s32.totalorder %s27, 3
      %p341 = pnand %p339, %p340
      %p342 = pneg %p341
      // Predicated region
      $region9: #{tpu_custom_call.1} parent=5 // pred_check
        _
      $region10: #{tpu_custom_call.1} parent=5 // pred_check_branch
        %344 = sbr.rel (%p341) target = $region12
      $region11: #{tpu_custom_call.1} parent=5 // pred_region
        %s345 = ssub.s32 %s27, 1
        // Predicated region
        $region13: #{tpu_custom_call.1} parent=11 // pred_check
          %p346 = pneg %p74
        $region14: #{tpu_custom_call.1} parent=11 // pred_check_branch
          %348 = sbr.rel (%p346) target = $region16
        $region15: #{tpu_custom_call.1} parent=11 // pred_region
          %s350 = ssub.s32 3072, 3072
          %351 = vsyncadd [#allocation7], %s350
          %s352 = sshll.u32 [#allocation6], 4
          %s353 = int_to_ptr.vmem [resolvable:$true] %s352
          %358 = dma.hbm_to_vmem [thread:$0]  %s1, 3072, %s353, [#allocation7], 192, 192, 12
        $region16: #{tpu_custom_call.1} parent=11 // pred_fallthru
          _
        // Predicated region
        $region17: #{tpu_custom_call.1} parent=11 // pred_check
          %p359 = pneg %p95
        $region18: #{tpu_custom_call.1} parent=11 // pred_check_branch
          %361 = sbr.rel (%p359) target = $region20
        $region19: #{tpu_custom_call.1} parent=11 // pred_region
          _
        $region20: #{tpu_custom_call.1} parent=11 // pred_fallthru
          _
        // Predicated region
        $region21: #{tpu_custom_call.1} parent=11 // pred_check
          %p362 = pneg %p116
        $region22: #{tpu_custom_call.1} parent=11 // pred_check_branch
          %364 = sbr.rel (%p362) target = $region24
        $region23: #{tpu_custom_call.1} parent=11 // pred_region
          %s366 = ssub.s32 1024, 1024
          %367 = vsyncadd [#allocation7], %s366
          %s368 = sshll.u32 [#allocation8], 4
          %s369 = int_to_ptr.vmem [resolvable:$true] %s368
          %374 = dma.hbm_to_vmem [thread:$0]  %s3, 1024, %s369, [#allocation7], 64, 64, 4
        $region24: #{tpu_custom_call.1} parent=11 // pred_fallthru
          _
        // Predicated region
        $region25: #{tpu_custom_call.1} parent=11 // pred_check
          %p375 = pneg %p137
        $region26: #{tpu_custom_call.1} parent=11 // pred_check_branch
          %377 = sbr.rel (%p375) target = $region28
        $region27: #{tpu_custom_call.1} parent=11 // pred_region
          _
        $region28: #{tpu_custom_call.1} parent=11 // pred_fallthru
          _
        // Predicated region
        $region29: #{tpu_custom_call.1} parent=11 // pred_check
          %p378 = pneg %p158
        $region30: #{tpu_custom_call.1} parent=11 // pred_check_branch
          %380 = sbr.rel (%p378) target = $region32
        $region31: #{tpu_custom_call.1} parent=11 // pred_region
          _
        $region32: #{tpu_custom_call.1} parent=11 // pred_fallthru
          _
        // Predicated region
        $region33: #{tpu_custom_call.1} parent=11 // pred_check
          %p381 = pneg %p179
        $region34: #{tpu_custom_call.1} parent=11 // pred_check_branch
          %383 = sbr.rel (%p381) target = $region36
        $region35: #{tpu_custom_call.1} parent=11 // pred_region
          _
        $region36: #{tpu_custom_call.1} parent=11 // pred_fallthru
          _
        // Predicated region
        $region37: #{tpu_custom_call.1} parent=11 // pred_check
          %p384 = pneg %p200
        $region38: #{tpu_custom_call.1} parent=11 // pred_check_branch
          %386 = sbr.rel (%p384) target = $region40
        $region39: #{tpu_custom_call.1} parent=11 // pred_region
          _
        $region40: #{tpu_custom_call.1} parent=11 // pred_fallthru
          _
        // Predicated region
        $region41: #{tpu_custom_call.1} parent=11 // pred_check
          %p387 = pneg %p221
        $region42: #{tpu_custom_call.1} parent=11 // pred_check_branch
          %389 = sbr.rel (%p387) target = $region44
        $region43: #{tpu_custom_call.1} parent=11 // pred_region
          _
        $region44: #{tpu_custom_call.1} parent=11 // pred_fallthru
          _
        // Predicated region
        $region45: #{tpu_custom_call.1} parent=11 // pred_check
          %p390 = pneg %p242
        $region46: #{tpu_custom_call.1} parent=11 // pred_check_branch
          %392 = sbr.rel (%p390) target = $region48
        $region47: #{tpu_custom_call.1} parent=11 // pred_region
          %s394 = ssub.s32 4096, 4096
          %395 = vsyncadd [#allocation10], %s394
          %s396 = sshll.u32 [#allocation9], 4
          %s397 = int_to_ptr.vmem [resolvable:$true] %s396
          %402 = dma.hbm_to_vmem [thread:$0]  %s9, 4096, %s397, [#allocation10], 256, 256, 16
        $region48: #{tpu_custom_call.1} parent=11 // pred_fallthru
          _
        // Predicated region
        $region49: #{tpu_custom_call.1} parent=11 // pred_check
          %p403 = pneg %p263
        $region50: #{tpu_custom_call.1} parent=11 // pred_check_branch
          %405 = sbr.rel (%p403) target = $region52
        $region51: #{tpu_custom_call.1} parent=11 // pred_region
          _
        $region52: #{tpu_custom_call.1} parent=11 // pred_fallthru
          _
        // Predicated region
        $region53: #{tpu_custom_call.1} parent=11 // pred_check
          %p406 = pneg %p284
        $region54: #{tpu_custom_call.1} parent=11 // pred_check_branch
          %408 = sbr.rel (%p406) target = $region56
        $region55: #{tpu_custom_call.1} parent=11 // pred_region
          %s410 = ssub.s32 4096, 4096
          %411 = vsyncadd [#allocation10], %s410
          %s412 = sshll.u32 [#allocation11], 4
          %s413 = int_to_ptr.vmem [resolvable:$true] %s412
          %418 = dma.hbm_to_vmem [thread:$0]  %s11, 4096, %s413, [#allocation10], 64, 64, 4
        $region56: #{tpu_custom_call.1} parent=11 // pred_fallthru
          _
        // Predicated region
        $region57: #{tpu_custom_call.1} parent=11 // pred_check
          %p419 = pneg %p305
        $region58: #{tpu_custom_call.1} parent=11 // pred_check_branch
          %421 = sbr.rel (%p419) target = $region60
        $region59: #{tpu_custom_call.1} parent=11 // pred_region
          _
        $region60: #{tpu_custom_call.1} parent=11 // pred_fallthru
          _
      $region12: #{tpu_custom_call.1} parent=5 // pred_fallthru
        _
      %p422 = scmp.lt.s32.totalorder %s27, 2
      // Predicated region
      $region61: #{tpu_custom_call.1} parent=5 // pred_check
        %p423 = pneg %p422
      $region62: #{tpu_custom_call.1} parent=5 // pred_check_branch
        %425 = sbr.rel (%p423) target = $region64
      $region63: #{tpu_custom_call.1} parent=5 // pred_region
        // Predicated region
        $region65: #{tpu_custom_call.1} parent=63 // pred_check
          %p426 = pneg %p47
        $region66: #{tpu_custom_call.1} parent=63 // pred_check_branch
          %428 = sbr.rel (%p426) target = $region68
        $region67: #{tpu_custom_call.1} parent=63 // pred_region
          %s429 = sand.u32 %s37, 1
          %s430 = scalar_lea.sflag [#allocation4], %s429
          %s431 = sand.u32 %s37, 1
          %s432 = smul.addr %s431, 16
          %s433 = scalar_lea.vmem [#allocation3], %s432
          %s435 = ssub.s32 256, 256
          %436 = vsyncadd %s430, %s435
          %s437 = smul.addr %s27, 2
          %s438 = smul.addr %s437, 128
          %s439 = scalar_lea.hbm %s0, %s438
          %s440 = sshll.u32 %s433, 4
          %s441 = int_to_ptr.vmem [resolvable:$true] %s440
          %446 = dma.hbm_to_vmem [thread:$0]  %s439, 256, %s441, %s430, 128, 128, 8
        $region68: #{tpu_custom_call.1} parent=63 // pred_fallthru
          _
      $region64: #{tpu_custom_call.1} parent=5 // pred_fallthru
        _
      %p447 = scmp.le.s32.totalorder 1, %s27
      %p448 = scmp.lt.s32.totalorder %s27, 3
      %p449 = pnand %p447, %p448
      %p450 = pneg %p449
      // Predicated region
      $region69: #{tpu_custom_call.1} parent=5 // pred_check
        _
      $region70: #{tpu_custom_call.1} parent=5 // pred_check_branch
        %452 = sbr.rel (%p449) target = $region72
      $region71: #{tpu_custom_call.1} parent=5 // pred_region
        %s453 = ssub.s32 %s27, 1
        %s454 = sand.u32 %s40, 1
        %s455 = scalar_lea.sflag [#allocation4], %s454
        %s456 = sand.u32 %s40, 1
        %s457 = smul.addr %s456, 16
        %s458 = scalar_lea.vmem [#allocation3], %s457
        // Predicated region
        $region73: #{tpu_custom_call.1} parent=71 // pred_check
          %p459 = pneg %p53
        $region74: #{tpu_custom_call.1} parent=71 // pred_check_branch
          %461 = sbr.rel (%p459) target = $region76
        $region75: #{tpu_custom_call.1} parent=71 // pred_region
          %462 = dma.done %s455, 256
        $region76: #{tpu_custom_call.1} parent=71 // pred_fallthru
          _
        // Predicated region
        $region77: #{tpu_custom_call.1} parent=71 // pred_check
          %p463 = pneg %p74
        $region78: #{tpu_custom_call.1} parent=71 // pred_check_branch
          %465 = sbr.rel (%p463) target = $region80
        $region79: #{tpu_custom_call.1} parent=71 // pred_region
          %466 = dma.done [#allocation7], 3072
        $region80: #{tpu_custom_call.1} parent=71 // pred_fallthru
          _
        // Predicated region
        $region81: #{tpu_custom_call.1} parent=71 // pred_check
          %p467 = pneg %p116
        $region82: #{tpu_custom_call.1} parent=71 // pred_check_branch
          %469 = sbr.rel (%p467) target = $region84
        $region83: #{tpu_custom_call.1} parent=71 // pred_region
          %470 = dma.done [#allocation7], 1024
        $region84: #{tpu_custom_call.1} parent=71 // pred_fallthru
          _
        // Predicated region
        $region85: #{tpu_custom_call.1} parent=71 // pred_check
          %p471 = pneg %p242
        $region86: #{tpu_custom_call.1} parent=71 // pred_check_branch
          %473 = sbr.rel (%p471) target = $region88
        $region87: #{tpu_custom_call.1} parent=71 // pred_region
          %474 = dma.done [#allocation10], 4096
        $region88: #{tpu_custom_call.1} parent=71 // pred_fallthru
          _
        // Predicated region
        $region89: #{tpu_custom_call.1} parent=71 // pred_check
          %p475 = pneg %p284
        $region90: #{tpu_custom_call.1} parent=71 // pred_check_branch
          %477 = sbr.rel (%p475) target = $region92
        $region91: #{tpu_custom_call.1} parent=71 // pred_region
          %478 = dma.done [#allocation10], 4096
        $region92: #{tpu_custom_call.1} parent=71 // pred_fallthru
          _
        %s479 = sand.u32 %s40, 1
        %s480 = scalar_lea.sflag [#allocation4], %s479
        %s481 = sand.u32 %s40, 1
        %s482 = smul.addr %s481, 16
        %s483 = scalar_lea.vmem [#allocation3], %s482
        %p484 = pneg %p53
        %p485 = pneg %p50
        %p486 = pneg %p74
        %p487 = pneg %p71
        %p488 = pneg %p95
        %p489 = pneg %p92
        %p490 = pneg %p116
        %p491 = pneg %p113
        %p492 = pneg %p137
        %p493 = pneg %p134
        %p494 = pneg %p158
        %p495 = pneg %p155
        %p496 = pneg %p179
        %p497 = pneg %p176
        %p498 = pneg %p200
        %p499 = pneg %p197
        %p500 = pneg %p221
        %p501 = pneg %p218
        %p502 = pneg %p242
        %p503 = pneg %p239
        %p504 = pneg %p263
        %p505 = pneg %p260
        %p506 = pneg %p284
        %p507 = pneg %p281
        %p508 = pneg %p305
        %p509 = pneg %p302
        %p510 = pneg %p331
        %p511 = pneg %p328
        %s512 = sand.u32 %s318, 1
        %s513 = scalar_lea.sflag [#allocation5], %s512
        %s514 = sand.u32 %s318, 1
        %s515 = smul.addr %s514, 16
        %s516 = scalar_lea.vmem [#allocation12], %s515
        %v518 = vld [vmem:[%s458] sm:$0xff]
        %v519 = vld [vmem:[%s458 + $0x8] sm:$0xff]
        %v520 = vld [vmem:[%s5] sm:$0x1]
        %v521 = vld [vmem:[%s6] sm:$0x1]
        %522 = vadd.xlane.f32.xlu0 %v518
        %v523 = vpop.xlane.xlu0 %522
        %524 = vadd.xlane.f32.xlu0 %v519
        %v525 = vpop.xlane.xlu0 %524
        %v526 = vrcp.pop 128.0
        %v527 = vmul.f32 %v523, %v526
        %v528 = vmul.f32 %v525, %v526
        %v529 = vsub.f32 %v518, %v527
        %v530 = vsub.f32 %v519, %v528
        %v531 = vmul.f32 %v529, %v529
        %v532 = vmul.f32 %v530, %v530
        %533 = vadd.xlane.f32.xlu0 %v531
        %v534 = vpop.xlane.xlu0 %533
        %535 = vadd.xlane.f32.xlu0 %v532
        %v536 = vpop.xlane.xlu0 %535
        %v537 = vmul.f32 %v534, %v526
        %v538 = vmul.f32 %v536, %v526
        %v539 = vadd.f32 %v537, 1e-05
        %v540 = vadd.f32 %v538, 1e-05
        %v541 = vrsqrt.pop %v539
        %v542 = vrsqrt.pop %v540
        %v543 = vmul.f32 %v529, %v541
        %v544 = vmul.f32 %v530, %v542
        %v546 = vlaneseq
        %v547 = vshrl.u32 %v546, 7
        %v548 = vsub.s32 0, %v547
        %v549 = vrot.slane %v520, %v548
        %v551 = vmul.f32 %v543, %v549
        %v552 = vmul.f32 %v544, %v549
        %v554 = vlaneseq
        %v555 = vshrl.u32 %v554, 7
        %v556 = vsub.s32 0, %v555
        %v557 = vrot.slane %v521, %v556
        %v559 = vadd.f32 %v551, %v557
        %v560 = vadd.f32 %v552, %v557
        %v561 = vpack.c.bf16 %v560, %v559
        %v562 = vld [vmem:[#allocation6] sm:$0xff]
        %v563 = vld [vmem:[#allocation6 + $0x8] sm:$0xf]
        %v564 = vld [vmem:[#allocation6 + $0xc] sm:$0xff]
        %v565 = vld [vmem:[#allocation6 + $0x14] sm:$0xf]
        %v566 = vld [vmem:[#allocation6 + $0x18] sm:$0xff]
        %v567 = vld [vmem:[#allocation6 + $0x20] sm:$0xf]
        %v568 = vld [vmem:[#allocation6 + $0x24] sm:$0xff]
        %v569 = vld [vmem:[#allocation6 + $0x2c] sm:$0xf]
        %v570 = vld [vmem:[#allocation6 + $0x30] sm:$0xff]
        %v571 = vld [vmem:[#allocation6 + $0x38] sm:$0xf]
        %v572 = vld [vmem:[#allocation6 + $0x3c] sm:$0xff]
        %v573 = vld [vmem:[#allocation6 + $0x44] sm:$0xf]
        %v574 = vld [vmem:[#allocation6 + $0x48] sm:$0xff]
        %v575 = vld [vmem:[#allocation6 + $0x50] sm:$0xf]
        %v576 = vld [vmem:[#allocation6 + $0x54] sm:$0xff]
        %v577 = vld [vmem:[#allocation6 + $0x5c] sm:$0xf]
        %v578 = vld [vmem:[#allocation6 + $0x60] sm:$0xff]
        %v579 = vld [vmem:[#allocation6 + $0x68] sm:$0xf]
        %v580 = vld [vmem:[#allocation6 + $0x6c] sm:$0xff]
        %v581 = vld [vmem:[#allocation6 + $0x74] sm:$0xf]
        %v582 = vld [vmem:[#allocation6 + $0x78] sm:$0xff]
        %v583 = vld [vmem:[#allocation6 + $0x80] sm:$0xf]
        %v584 = vld [vmem:[#allocation6 + $0x84] sm:$0xff]
        %v585 = vld [vmem:[#allocation6 + $0x8c] sm:$0xf]
        %v586 = vld [vmem:[#allocation6 + $0x90] sm:$0xff]
        %v587 = vld [vmem:[#allocation6 + $0x98] sm:$0xf]
        %v588 = vld [vmem:[#allocation6 + $0x9c] sm:$0xff]
        %v589 = vld [vmem:[#allocation6 + $0xa4] sm:$0xf]
        %v590 = vld [vmem:[#allocation6 + $0xa8] sm:$0xff]
        %v591 = vld [vmem:[#allocation6 + $0xb0] sm:$0xf]
        %v592 = vld [vmem:[#allocation6 + $0xb4] sm:$0xff]
        %v593 = vld [vmem:[#allocation6 + $0xbc] sm:$0xf]
        %v594 = vld [vmem:[%s2] sm:$0x7]
        %v596 = vlaneseq
        %v597 = vshrl.u32 %v596, 7
        %v598 = vsub.s32 0, %v597
        %v599 = vrot.slane %v594, %v598
        %v600 = vlaneseq
        %v601 = vshrl.u32 %v600, 7
        %v602 = vsub.s32 1, %v601
        %v603 = vrot.slane %v594, %v602
        %v604 = vlaneseq
        %v605 = vshrl.u32 %v604, 7
        %v606 = vsub.s32 2, %v605
        %v607 = vrot.slane %v594, %v606
        %v643 = vunpack.c.l.b16 %v562
        %v644 = vunpack.c.h.b16 %v562
        %v645 = vunpack.c.l.b16 %v563
        %v646 = vunpack.c.l.b16 %v564
        %v647 = vunpack.c.h.b16 %v564
        %v648 = vunpack.c.l.b16 %v565
        %v649 = vunpack.c.l.b16 %v566
        %v650 = vunpack.c.h.b16 %v566
        %v651 = vunpack.c.l.b16 %v567
        %v652 = vunpack.c.l.b16 %v568
        %v653 = vunpack.c.h.b16 %v568
        %v654 = vunpack.c.l.b16 %v569
        %v655 = vunpack.c.l.b16 %v570
        %v656 = vunpack.c.h.b16 %v570
        %v657 = vunpack.c.l.b16 %v571
        %v658 = vunpack.c.l.b16 %v572
        %v659 = vunpack.c.h.b16 %v572
        %v660 = vunpack.c.l.b16 %v573
        %v661 = vunpack.c.l.b16 %v574
        %v662 = vunpack.c.h.b16 %v574
        %v663 = vunpack.c.l.b16 %v575
        %v664 = vunpack.c.l.b16 %v576
        %v665 = vunpack.c.h.b16 %v576
        %v666 = vunpack.c.l.b16 %v577
        %v667 = vunpack.c.l.b16 %v578
        %v668 = vunpack.c.h.b16 %v578
        %v669 = vunpack.c.l.b16 %v579
        %v670 = vunpack.c.l.b16 %v580
        %v671 = vunpack.c.h.b16 %v580
        %v672 = vunpack.c.l.b16 %v581
        %v673 = vunpack.c.l.b16 %v582
        %v674 = vunpack.c.h.b16 %v582
        %v675 = vunpack.c.l.b16 %v583
        %v676 = vunpack.c.l.b16 %v584
        %v677 = vunpack.c.h.b16 %v584
        %v678 = vunpack.c.l.b16 %v585
        %v679 = vunpack.c.l.b16 %v586
        %v680 = vunpack.c.h.b16 %v586
        %v681 = vunpack.c.l.b16 %v587
        %v682 = vunpack.c.l.b16 %v588
        %v683 = vunpack.c.h.b16 %v588
        %v684 = vunpack.c.l.b16 %v589
        %v685 = vunpack.c.l.b16 %v590
        %v686 = vunpack.c.h.b16 %v590
        %v687 = vunpack.c.l.b16 %v591
        %v688 = vunpack.c.l.b16 %v592
        %v689 = vunpack.c.h.b16 %v592
        %v690 = vunpack.c.l.b16 %v593
        %v691 = vpack.c.b16 %v646, %v643
        %v692 = vpack.c.b16 %v647, %v644
        %v693 = vpack.c.b16 %v648, %v645
        %v694 = vpack.c.b16 %v652, %v649
        %v695 = vpack.c.b16 %v653, %v650
        %v696 = vpack.c.b16 %v654, %v651
        %v697 = vpack.c.b16 %v658, %v655
        %v698 = vpack.c.b16 %v659, %v656
        %v699 = vpack.c.b16 %v660, %v657
        %v700 = vpack.c.b16 %v664, %v661
        %v701 = vpack.c.b16 %v665, %v662
        %v702 = vpack.c.b16 %v666, %v663
        %v703 = vpack.c.b16 %v670, %v667
        %v704 = vpack.c.b16 %v671, %v668
        %v705 = vpack.c.b16 %v672, %v669
        %v706 = vpack.c.b16 %v676, %v673
        %v707 = vpack.c.b16 %v677, %v674
        %v708 = vpack.c.b16 %v678, %v675
        %v709 = vpack.c.b16 %v682, %v679
        %v710 = vpack.c.b16 %v683, %v680
        %v711 = vpack.c.b16 %v684, %v681
        %v712 = vpack.c.b16 %v688, %v685
        %v713 = vpack.c.b16 %v689, %v686
        %v714 = vpack.c.b16 %v690, %v687
        %739 = vmatprep.subr.bf16.mxu0 %v692
        %740 = vmatpush1.bf16.msra.mxu0 %v691
        %741 = vmatprep.subr.bf16.mxu0 %v695
        %742 = vmatpush1.bf16.msra.mxu0 %v694
        %743 = vmatprep.subr.bf16.mxu0 %v698
        %744 = vmatpush1.bf16.msra.mxu0 %v697
        %745 = vmatprep.subr.bf16.mxu0 %v701
        %746 = vmatpush1.bf16.msra.mxu0 %v700
        %747 = vmatprep.subr.bf16.mxu0 %v704
        %748 = vmatpush1.bf16.msra.mxu0 %v703
        %749 = vmatprep.subr.bf16.mxu0 %v707
        %750 = vmatpush1.bf16.msra.mxu0 %v706
        %751 = vmatprep.subr.bf16.mxu0 %v710
        %752 = vmatpush1.bf16.msra.mxu0 %v709
        %753 = vmatprep.subr.bf16.mxu0 %v713
        %754 = vmatpush1.bf16.msra.mxu0 %v712
        %755 = vmatprep.subr.bf16.mxu0 0
        %756 = vmatpush1.bf16.msra.mxu0 0
        %757 = vmatprep.subr.bf16.mxu0 0
        %758 = vmatpush1.bf16.msra.mxu0 0
        %759 = vmatprep.subr.bf16.mxu0 0
        %760 = vmatpush1.bf16.msra.mxu0 0
        %761 = vmatprep.subr.bf16.mxu0 0
        %762 = vmatpush1.bf16.msra.mxu0 0
        %763 = vmatprep.subr.bf16.mxu0 0
        %764 = vmatpush1.bf16.msra.mxu0 0
        %765 = vmatprep.subr.bf16.mxu0 0
        %766 = vmatpush1.bf16.msra.mxu0 0
        %767 = vmatprep.subr.bf16.mxu0 0
        %768 = vmatpush1.bf16.msra.mxu0 0
        %769 = vmatprep.subr.bf16.mxu0 0
        %770 = vmatpush1.bf16.msra.mxu0 0
        %771 = vmatprep.mubr.bf16.mxu0 0
        %772 = vmatmul.mubr.bf16.gmra.mrb[0].mxu0 %v561
        %v773 = vpop.f32.mrb[0].mxu0
        %v774 = vadd.f32 %v599, %v773
        %v775 = vpop.f32.mrb[0].mxu0
        %v776 = vadd.f32 %v603, %v775
        %v777 = vpop.f32.mrb[0].mxu0
        %v778 = vadd.f32 %v599, %v777
        %v779 = vpop.f32.mrb[0].mxu0
        %v780 = vadd.f32 %v603, %v779
        %781 = vdwg.mxu0
        %782 = vmatprep.subr.bf16.mxu0 0
        %783 = vmatpush1.bf16.msra.mxu0 %v693
        %784 = vmatprep.subr.bf16.mxu0 0
        %785 = vmatpush1.bf16.msra.mxu0 %v696
        %786 = vmatprep.subr.bf16.mxu0 0
        %787 = vmatpush1.bf16.msra.mxu0 %v699
        %788 = vmatprep.subr.bf16.mxu0 0
        %789 = vmatpush1.bf16.msra.mxu0 %v702
        %790 = vmatprep.subr.bf16.mxu0 0
        %791 = vmatpush1.bf16.msra.mxu0 %v705
        %792 = vmatprep.subr.bf16.mxu0 0
        %793 = vmatpush1.bf16.msra.mxu0 %v708
        %794 = vmatprep.subr.bf16.mxu0 0
        %795 = vmatpush1.bf16.msra.mxu0 %v711
        %796 = vmatprep.subr.bf16.mxu0 0
        %797 = vmatpush1.bf16.msra.mxu0 %v714
        %798 = vmatprep.subr.bf16.mxu0 0
        %799 = vmatpush1.bf16.msra.mxu0 0
        %800 = vmatprep.subr.bf16.mxu0 0
        %801 = vmatpush1.bf16.msra.mxu0 0
        %802 = vmatprep.subr.bf16.mxu0 0
        %803 = vmatpush1.bf16.msra.mxu0 0
        %804 = vmatprep.subr.bf16.mxu0 0
        %805 = vmatpush1.bf16.msra.mxu0 0
        %806 = vmatprep.subr.bf16.mxu0 0
        %807 = vmatpush1.bf16.msra.mxu0 0
        %808 = vmatprep.subr.bf16.mxu0 0
        %809 = vmatpush1.bf16.msra.mxu0 0
        %810 = vmatprep.subr.bf16.mxu0 0
        %811 = vmatpush1.bf16.msra.mxu0 0
        %812 = vmatprep.subr.bf16.mxu0 0
        %813 = vmatpush1.bf16.msra.mxu0 0
        %814 = vmatprep.mubr.bf16.mxu0 0
        %815 = vmatmul.mubr.bf16.gmra.mrb[0].mxu0 %v561
        %v816 = vpop.f32.mrb[0].mxu0
        %v817 = vadd.f32 %v607, %v816
        %v818 = vpop.f32.mrb[0].mxu0
        %v819 = vpop.f32.mrb[0].mxu0
        %v820 = vadd.f32 %v607, %v819
        %v821 = vpop.f32.mrb[0].mxu0
        %822 = vdwg.mxu0
        %v823 = vpack.c.bf16 %v778, %v774
        %v824 = vpack.c.bf16 %v780, %v776
        %v825 = vpack.c.bf16 %v820, %v817
        %vm826 = vcmask 261120
        %v828 = vsel %vm826, %v823, 0
        %v831 = vsel %vm826, %v824, 0
        %833 = vmatprep.subr.bf16.mxu0 0
        %834 = vmatpush1.bf16.xpose.msra.mxu0 %v831
        %835 = vmatprep.subr.bf16.mxu0 0
        %836 = vmatpush1.bf16.xpose.msra.mxu0 0
        %837 = vmatprep.subr.bf16.mxu0 0
        %838 = vmatpush1.bf16.xpose.msra.mxu0 0
        %839 = vmatprep.subr.bf16.mxu0 0
        %840 = vmatpush1.bf16.xpose.msra.mxu0 0
        %841 = vmatprep.subr.bf16.mxu0 0
        %842 = vmatpush1.bf16.xpose.msra.mxu0 0
        %843 = vmatprep.subr.bf16.mxu0 0
        %844 = vmatpush1.bf16.xpose.msra.mxu0 0
        %845 = vmatprep.subr.bf16.mxu0 0
        %846 = vmatpush1.bf16.xpose.msra.mxu0 0
        %847 = vmatprep.subr.bf16.mxu0 0
        %848 = vmatpush1.bf16.xpose.msra.mxu0 0
        %849 = vmatprep.subr.bf16.mxu0 0
        %850 = vmatpush1.bf16.xpose.msra.mxu0 0
        %851 = vmatprep.subr.bf16.mxu0 0
        %852 = vmatpush1.bf16.xpose.msra.mxu0 0
        %853 = vmatprep.subr.bf16.mxu0 0
        %854 = vmatpush1.bf16.xpose.msra.mxu0 0
        %855 = vmatprep.subr.bf16.mxu0 0
        %856 = vmatpush1.bf16.xpose.msra.mxu0 0
        %857 = vmatprep.subr.bf16.mxu0 0
        %858 = vmatpush1.bf16.xpose.msra.mxu0 0
        %859 = vmatprep.subr.bf16.mxu0 0
        %860 = vmatpush1.bf16.xpose.msra.mxu0 0
        %861 = vmatprep.subr.bf16.mxu0 0
        %862 = vmatpush1.bf16.xpose.msra.mxu0 0
        %863 = vmatprep.subr.bf16.mxu0 0
        %864 = vmatpush1.bf16.xpose.msra.mxu0 0
        %865 = vmatprep.mubr.bf16.mxu0 0
        %866 = vmatmul.mubr.bf16.gmra.mrb[0].mxu0 %v828
        %v867 = vpop.f32.mrb[0].mxu0
        %v868 = vadd.f32 0.0, %v867
        %v869 = vpop.f32.mrb[0].mxu0
        %v870 = vpop.f32.mrb[0].mxu0
        %v871 = vadd.f32 0.0, %v870
        %v872 = vpop.f32.mrb[0].mxu0
        %873 = vdwg.mxu0
        %vm874 = vcmask 130048
        %v875 = vsel %vm874, %v868, -inf
        %876 = vmax.xlane.f32.xlu0 %v875
        %v877 = vpop.xlane.xlu0 %876
        %v878 = vsel %vm874, %v871, -inf
        %879 = vmax.xlane.f32.xlu0 %v878
        %v880 = vpop.xlane.xlu0 %879
        %v881 = vsub.f32 %v868, %v877
        %v882 = vsub.f32 %v871, %v880
        %v883 = vmul.f32 %v881, 1.442695
        %v884 = vpow.pop %v883
        %v885 = vmul.f32 %v882, 1.442695
        %v886 = vpow.pop %v885
        %v887 = vsel %vm874, %v884, 0.0
        %888 = vadd.xlane.f32.xlu0 %v887
        %v889 = vpop.xlane.xlu0 %888
        %v890 = vsel %vm874, %v886, 0.0
        %891 = vadd.xlane.f32.xlu0 %v890
        %v892 = vpop.xlane.xlu0 %891
        %v893 = vrcp.pop %v889
        %v894 = vrcp.pop %v892
        %v895 = vmul.f32 %v884, %v893
        %v896 = vmul.f32 %v886, %v894
        %v897 = vpack.c.bf16 %v896, %v895
        %v899 = vsel %vm874, %v897, 0
        %901 = vmatprep.subr.bf16.mxu0 0
        %902 = vmatpush1.bf16.msra.mxu0 %v825
        %903 = vmatprep.subr.bf16.mxu0 0
        %904 = vmatpush1.bf16.msra.mxu0 0
        %905 = vmatprep.subr.bf16.mxu0 0
        %906 = vmatpush1.bf16.msra.mxu0 0
        %907 = vmatprep.subr.bf16.mxu0 0
        %908 = vmatpush1.bf16.msra.mxu0 0
        %909 = vmatprep.subr.bf16.mxu0 0
        %910 = vmatpush1.bf16.msra.mxu0 0
        %911 = vmatprep.subr.bf16.mxu0 0
        %912 = vmatpush1.bf16.msra.mxu0 0
        %913 = vmatprep.subr.bf16.mxu0 0
        %914 = vmatpush1.bf16.msra.mxu0 0
        %915 = vmatprep.subr.bf16.mxu0 0
        %916 = vmatpush1.bf16.msra.mxu0 0
        %917 = vmatprep.subr.bf16.mxu0 0
        %918 = vmatpush1.bf16.msra.mxu0 0
        %919 = vmatprep.subr.bf16.mxu0 0
        %920 = vmatpush1.bf16.msra.mxu0 0
        %921 = vmatprep.subr.bf16.mxu0 0
        %922 = vmatpush1.bf16.msra.mxu0 0
        %923 = vmatprep.subr.bf16.mxu0 0
        %924 = vmatpush1.bf16.msra.mxu0 0
        %925 = vmatprep.subr.bf16.mxu0 0
        %926 = vmatpush1.bf16.msra.mxu0 0
        %927 = vmatprep.subr.bf16.mxu0 0
        %928 = vmatpush1.bf16.msra.mxu0 0
        %929 = vmatprep.subr.bf16.mxu0 0
        %930 = vmatpush1.bf16.msra.mxu0 0
        %931 = vmatprep.subr.bf16.mxu0 0
        %932 = vmatpush1.bf16.msra.mxu0 0
        %933 = vmatprep.mubr.bf16.mxu0 0
        %934 = vmatmul.mubr.bf16.gmra.mrb[0].mxu0 %v899
        %v935 = vpop.f32.mrb[0].mxu0
        %v936 = vadd.f32 0.0, %v935
        %v937 = vpop.f32.mrb[0].mxu0
        %v938 = vpop.f32.mrb[0].mxu0
        %v939 = vadd.f32 0.0, %v938
        %v940 = vpop.f32.mrb[0].mxu0
        %941 = vdwg.mxu0
        %v942 = vpack.c.bf16 %v939, %v936
        %943 = vst.msk [vmem:[#allocation2] sm:$0xff] %vm826, %v942
        %945 = vrot.lane.b32.xlu0 %v823, 96
        %v946 = vpop.permute.xlu0 %945
        %948 = vrot.lane.b32.xlu0 %v824, 96
        %v949 = vpop.permute.xlu0 %948
        %v951 = vsel %vm826, %v946, 0
        %v954 = vsel %vm826, %v949, 0
        %956 = vmatprep.subr.bf16.mxu0 0
        %957 = vmatpush1.bf16.xpose.msra.mxu0 %v954
        %958 = vmatprep.subr.bf16.mxu0 0
        %959 = vmatpush1.bf16.xpose.msra.mxu0 0
        %960 = vmatprep.subr.bf16.mxu0 0
        %961 = vmatpush1.bf16.xpose.msra.mxu0 0
        %962 = vmatprep.subr.bf16.mxu0 0
        %963 = vmatpush1.bf16.xpose.msra.mxu0 0
        %964 = vmatprep.subr.bf16.mxu0 0
        %965 = vmatpush1.bf16.xpose.msra.mxu0 0
        %966 = vmatprep.subr.bf16.mxu0 0
        %967 = vmatpush1.bf16.xpose.msra.mxu0 0
        %968 = vmatprep.subr.bf16.mxu0 0
        %969 = vmatpush1.bf16.xpose.msra.mxu0 0
        %970 = vmatprep.subr.bf16.mxu0 0
        %971 = vmatpush1.bf16.xpose.msra.mxu0 0
        %972 = vmatprep.subr.bf16.mxu0 0
        %973 = vmatpush1.bf16.xpose.msra.mxu0 0
        %974 = vmatprep.subr.bf16.mxu0 0
        %975 = vmatpush1.bf16.xpose.msra.mxu0 0
        %976 = vmatprep.subr.bf16.mxu0 0
        %977 = vmatpush1.bf16.xpose.msra.mxu0 0
        %978 = vmatprep.subr.bf16.mxu0 0
        %979 = vmatpush1.bf16.xpose.msra.mxu0 0
        %980 = vmatprep.subr.bf16.mxu0 0
        %981 = vmatpush1.bf16.xpose.msra.mxu0 0
        %982 = vmatprep.subr.bf16.mxu0 0
        %983 = vmatpush1.bf16.xpose.msra.mxu0 0
        %984 = vmatprep.subr.bf16.mxu0 0
        %985 = vmatpush1.bf16.xpose.msra.mxu0 0
        %986 = vmatprep.subr.bf16.mxu0 0
        %987 = vmatpush1.bf16.xpose.msra.mxu0 0
        %988 = vmatprep.mubr.bf16.mxu0 0
        %989 = vmatmul.mubr.bf16.gmra.mrb[0].mxu0 %v951
        %v990 = vpop.f32.mrb[0].mxu0
        %v991 = vadd.f32 0.0, %v990
        %v992 = vpop.f32.mrb[0].mxu0
        %v993 = vpop.f32.mrb[0].mxu0
        %v994 = vadd.f32 0.0, %v993
        %v995 = vpop.f32.mrb[0].mxu0
        %996 = vdwg.mxu0
        %v997 = vsel %vm874, %v991, -inf
        %998 = vmax.xlane.f32.xlu0 %v997
        %v999 = vpop.xlane.xlu0 %998
        %v1000 = vsel %vm874, %v994, -inf
        %1001 = vmax.xlane.f32.xlu0 %v1000
        %v1002 = vpop.xlane.xlu0 %1001
        %v1003 = vsub.f32 %v991, %v999
        %v1004 = vsub.f32 %v994, %v1002
        %v1005 = vmul.f32 %v1003, 1.442695
        %v1006 = vpow.pop %v1005
        %v1007 = vmul.f32 %v1004, 1.442695
        %v1008 = vpow.pop %v1007
        %v1009 = vsel %vm874, %v1006, 0.0
        %1010 = vadd.xlane.f32.xlu0 %v1009
        %v1011 = vpop.xlane.xlu0 %1010
        %v1012 = vsel %vm874, %v1008, 0.0
        %1013 = vadd.xlane.f32.xlu0 %v1012
        %v1014 = vpop.xlane.xlu0 %1013
        %v1015 = vrcp.pop %v1011
        %v1016 = vrcp.pop %v1014
        %v1017 = vmul.f32 %v1006, %v1015
        %v1018 = vmul.f32 %v1008, %v1016
        %v1019 = vpack.c.bf16 %v1018, %v1017
        %1021 = vrot.lane.b32.xlu0 %v825, 96
        %v1022 = vpop.permute.xlu0 %1021
        %v1025 = vsel %vm874, %v1019, 0
        %1027 = vmatprep.subr.bf16.mxu0 0
        %1028 = vmatpush1.bf16.msra.mxu0 %v1022
        %1029 = vmatprep.subr.bf16.mxu0 0
        %1030 = vmatpush1.bf16.msra.mxu0 0
        %1031 = vmatprep.subr.bf16.mxu0 0
        %1032 = vmatpush1.bf16.msra.mxu0 0
        %1033 = vmatprep.subr.bf16.mxu0 0
        %1034 = vmatpush1.bf16.msra.mxu0 0
        %1035 = vmatprep.subr.bf16.mxu0 0
        %1036 = vmatpush1.bf16.msra.mxu0 0
        %1037 = vmatprep.subr.bf16.mxu0 0
        %1038 = vmatpush1.bf16.msra.mxu0 0
        %1039 = vmatprep.subr.bf16.mxu0 0
        %1040 = vmatpush1.bf16.msra.mxu0 0
        %1041 = vmatprep.subr.bf16.mxu0 0
        %1042 = vmatpush1.bf16.msra.mxu0 0
        %1043 = vmatprep.subr.bf16.mxu0 0
        %1044 = vmatpush1.bf16.msra.mxu0 0
        %1045 = vmatprep.subr.bf16.mxu0 0
        %1046 = vmatpush1.bf16.msra.mxu0 0
        %1047 = vmatprep.subr.bf16.mxu0 0
        %1048 = vmatpush1.bf16.msra.mxu0 0
        %1049 = vmatprep.subr.bf16.mxu0 0
        %1050 = vmatpush1.bf16.msra.mxu0 0
        %1051 = vmatprep.subr.bf16.mxu0 0
        %1052 = vmatpush1.bf16.msra.mxu0 0
        %1053 = vmatprep.subr.bf16.mxu0 0
        %1054 = vmatpush1.bf16.msra.mxu0 0
        %1055 = vmatprep.subr.bf16.mxu0 0
        %1056 = vmatpush1.bf16.msra.mxu0 0
        %1057 = vmatprep.subr.bf16.mxu0 0
        %1058 = vmatpush1.bf16.msra.mxu0 0
        %1059 = vmatprep.mubr.bf16.mxu0 0
        %1060 = vmatmul.mubr.bf16.gmra.mrb[0].mxu0 %v1025
        %v1061 = vpop.f32.mrb[0].mxu0
        %v1062 = vadd.f32 0.0, %v1061
        %v1063 = vpop.f32.mrb[0].mxu0
        %v1064 = vpop.f32.mrb[0].mxu0
        %v1065 = vadd.f32 0.0, %v1064
        %v1066 = vpop.f32.mrb[0].mxu0
        %1067 = vdwg.mxu0
        %v1068 = vpack.c.bf16 %v1065, %v1062
        %1070 = vrot.lane.b32.xlu0 %v1068, 32
        %v1071 = vpop.permute.xlu0 %1070
        %vm1073 = vcmask 523520
        %1074 = vst.msk [vmem:[#allocation2] sm:$0xff] %vm1073, %v1071
        %1075 = vrot.lane.b32.xlu0 %v823, 64
        %v1076 = vpop.permute.xlu0 %1075
        %1077 = vrot.lane.b32.xlu0 %v824, 64
        %v1078 = vpop.permute.xlu0 %1077
        %v1080 = vsel %vm826, %v1076, 0
        %v1083 = vsel %vm826, %v1078, 0
        %1085 = vmatprep.subr.bf16.mxu0 0
        %1086 = vmatpush1.bf16.xpose.msra.mxu0 %v1083
        %1087 = vmatprep.subr.bf16.mxu0 0
        %1088 = vmatpush1.bf16.xpose.msra.mxu0 0
        %1089 = vmatprep.subr.bf16.mxu0 0
        %1090 = vmatpush1.bf16.xpose.msra.mxu0 0
        %1091 = vmatprep.subr.bf16.mxu0 0
        %1092 = vmatpush1.bf16.xpose.msra.mxu0 0
        %1093 = vmatprep.subr.bf16.mxu0 0
        %1094 = vmatpush1.bf16.xpose.msra.mxu0 0
        %1095 = vmatprep.subr.bf16.mxu0 0
        %1096 = vmatpush1.bf16.xpose.msra.mxu0 0
        %1097 = vmatprep.subr.bf16.mxu0 0
        %1098 = vmatpush1.bf16.xpose.msra.mxu0 0
        %1099 = vmatprep.subr.bf16.mxu0 0
        %1100 = vmatpush1.bf16.xpose.msra.mxu0 0
        %1101 = vmatprep.subr.bf16.mxu0 0
        %1102 = vmatpush1.bf16.xpose.msra.mxu0 0
        %1103 = vmatprep.subr.bf16.mxu0 0
        %1104 = vmatpush1.bf16.xpose.msra.mxu0 0
        %1105 = vmatprep.subr.bf16.mxu0 0
        %1106 = vmatpush1.bf16.xpose.msra.mxu0 0
        %1107 = vmatprep.subr.bf16.mxu0 0
        %1108 = vmatpush1.bf16.xpose.msra.mxu0 0
        %1109 = vmatprep.subr.bf16.mxu0 0
        %1110 = vmatpush1.bf16.xpose.msra.mxu0 0
        %1111 = vmatprep.subr.bf16.mxu0 0
        %1112 = vmatpush1.bf16.xpose.msra.mxu0 0
        %1113 = vmatprep.subr.bf16.mxu0 0
        %1114 = vmatpush1.bf16.xpose.msra.mxu0 0
        %1115 = vmatprep.subr.bf16.mxu0 0
        %1116 = vmatpush1.bf16.xpose.msra.mxu0 0
        %1117 = vmatprep.mubr.bf16.mxu0 0
        %1118 = vmatmul.mubr.bf16.gmra.mrb[0].mxu0 %v1080
        %v1119 = vpop.f32.mrb[0].mxu0
        %v1120 = vadd.f32 0.0, %v1119
        %v1121 = vpop.f32.mrb[0].mxu0
        %v1122 = vpop.f32.mrb[0].mxu0
        %v1123 = vadd.f32 0.0, %v1122
        %v1124 = vpop.f32.mrb[0].mxu0
        %1125 = vdwg.mxu0
        %v1126 = vsel %vm874, %v1120, -inf
        %1127 = vmax.xlane.f32.xlu0 %v1126
        %v1128 = vpop.xlane.xlu0 %1127
        %v1129 = vsel %vm874, %v1123, -inf
        %1130 = vmax.xlane.f32.xlu0 %v1129
        %v1131 = vpop.xlane.xlu0 %1130
        %v1132 = vsub.f32 %v1120, %v1128
        %v1133 = vsub.f32 %v1123, %v1131
        %v1134 = vmul.f32 %v1132, 1.442695
        %v1135 = vpow.pop %v1134
        %v1136 = vmul.f32 %v1133, 1.442695
        %v1137 = vpow.pop %v1136
        %v1138 = vsel %vm874, %v1135, 0.0
        %1139 = vadd.xlane.f32.xlu0 %v1138
        %v1140 = vpop.xlane.xlu0 %1139
        %v1141 = vsel %vm874, %v1137, 0.0
        %1142 = vadd.xlane.f32.xlu0 %v1141
        %v1143 = vpop.xlane.xlu0 %1142
        %v1144 = vrcp.pop %v1140
        %v1145 = vrcp.pop %v1143
        %v1146 = vmul.f32 %v1135, %v1144
        %v1147 = vmul.f32 %v1137, %v1145
        %v1148 = vpack.c.bf16 %v1147, %v1146
        %1149 = vrot.lane.b32.xlu0 %v825, 64
        %v1150 = vpop.permute.xlu0 %1149
        %v1153 = vsel %vm874, %v1148, 0
        %1155 = vmatprep.subr.bf16.mxu0 0
        %1156 = vmatpush1.bf16.msra.mxu0 %v1150
        %1157 = vmatprep.subr.bf16.mxu0 0
        %1158 = vmatpush1.bf16.msra.mxu0 0
        %1159 = vmatprep.subr.bf16.mxu0 0
        %1160 = vmatpush1.bf16.msra.mxu0 0
        %1161 = vmatprep.subr.bf16.mxu0 0
        %1162 = vmatpush1.bf16.msra.mxu0 0
        %1163 = vmatprep.subr.bf16.mxu0 0
        %1164 = vmatpush1.bf16.msra.mxu0 0
        %1165 = vmatprep.subr.bf16.mxu0 0
        %1166 = vmatpush1.bf16.msra.mxu0 0
        %1167 = vmatprep.subr.bf16.mxu0 0
        %1168 = vmatpush1.bf16.msra.mxu0 0
        %1169 = vmatprep.subr.bf16.mxu0 0
        %1170 = vmatpush1.bf16.msra.mxu0 0
        %1171 = vmatprep.subr.bf16.mxu0 0
        %1172 = vmatpush1.bf16.msra.mxu0 0
        %1173 = vmatprep.subr.bf16.mxu0 0
        %1174 = vmatpush1.bf16.msra.mxu0 0
        %1175 = vmatprep.subr.bf16.mxu0 0
        %1176 = vmatpush1.bf16.msra.mxu0 0
        %1177 = vmatprep.subr.bf16.mxu0 0
        %1178 = vmatpush1.bf16.msra.mxu0 0
        %1179 = vmatprep.subr.bf16.mxu0 0
        %1180 = vmatpush1.bf16.msra.mxu0 0
        %1181 = vmatprep.subr.bf16.mxu0 0
        %1182 = vmatpush1.bf16.msra.mxu0 0
        %1183 = vmatprep.subr.bf16.mxu0 0
        %1184 = vmatpush1.bf16.msra.mxu0 0
        %1185 = vmatprep.subr.bf16.mxu0 0
        %1186 = vmatpush1.bf16.msra.mxu0 0
        %1187 = vmatprep.mubr.bf16.mxu0 0
        %1188 = vmatmul.mubr.bf16.gmra.mrb[0].mxu0 %v1153
        %v1189 = vpop.f32.mrb[0].mxu0
        %v1190 = vadd.f32 0.0, %v1189
        %v1191 = vpop.f32.mrb[0].mxu0
        %v1192 = vpop.f32.mrb[0].mxu0
        %v1193 = vadd.f32 0.0, %v1192
        %v1194 = vpop.f32.mrb[0].mxu0
        %1195 = vdwg.mxu0
        %v1196 = vpack.c.bf16 %v1193, %v1190
        %1198 = vrot.lane.b32.xlu0 %v1196, 64
        %v1199 = vpop.permute.xlu0 %1198
        %vm1201 = vcmask 785920
        %1202 = vst.msk [vmem:[#allocation2] sm:$0xff] %vm1201, %v1199
        %1203 = vrot.lane.b32.xlu0 %v823, 32
        %v1204 = vpop.permute.xlu0 %1203
        %1205 = vrot.lane.b32.xlu0 %v824, 32
        %v1206 = vpop.permute.xlu0 %1205
        %v1208 = vsel %vm826, %v1204, 0
        %v1211 = vsel %vm826, %v1206, 0
        %1213 = vmatprep.subr.bf16.mxu0 0
        %1214 = vmatpush1.bf16.xpose.msra.mxu0 %v1211
        %1215 = vmatprep.subr.bf16.mxu0 0
        %1216 = vmatpush1.bf16.xpose.msra.mxu0 0
        %1217 = vmatprep.subr.bf16.mxu0 0
        %1218 = vmatpush1.bf16.xpose.msra.mxu0 0
        %1219 = vmatprep.subr.bf16.mxu0 0
        %1220 = vmatpush1.bf16.xpose.msra.mxu0 0
        %1221 = vmatprep.subr.bf16.mxu0 0
        %1222 = vmatpush1.bf16.xpose.msra.mxu0 0
        %1223 = vmatprep.subr.bf16.mxu0 0
        %1224 = vmatpush1.bf16.xpose.msra.mxu0 0
        %1225 = vmatprep.subr.bf16.mxu0 0
        %1226 = vmatpush1.bf16.xpose.msra.mxu0 0
        %1227 = vmatprep.subr.bf16.mxu0 0
        %1228 = vmatpush1.bf16.xpose.msra.mxu0 0
        %1229 = vmatprep.subr.bf16.mxu0 0
        %1230 = vmatpush1.bf16.xpose.msra.mxu0 0
        %1231 = vmatprep.subr.bf16.mxu0 0
        %1232 = vmatpush1.bf16.xpose.msra.mxu0 0
        %1233 = vmatprep.subr.bf16.mxu0 0
        %1234 = vmatpush1.bf16.xpose.msra.mxu0 0
        %1235 = vmatprep.subr.bf16.mxu0 0
        %1236 = vmatpush1.bf16.xpose.msra.mxu0 0
        %1237 = vmatprep.subr.bf16.mxu0 0
        %1238 = vmatpush1.bf16.xpose.msra.mxu0 0
        %1239 = vmatprep.subr.bf16.mxu0 0
        %1240 = vmatpush1.bf16.xpose.msra.mxu0 0
        %1241 = vmatprep.subr.bf16.mxu0 0
        %1242 = vmatpush1.bf16.xpose.msra.mxu0 0
        %1243 = vmatprep.subr.bf16.mxu0 0
        %1244 = vmatpush1.bf16.xpose.msra.mxu0 0
        %1245 = vmatprep.mubr.bf16.mxu0 0
        %1246 = vmatmul.mubr.bf16.gmra.mrb[0].mxu0 %v1208
        %v1247 = vpop.f32.mrb[0].mxu0
        %v1248 = vadd.f32 0.0, %v1247
        %v1249 = vpop.f32.mrb[0].mxu0
        %v1250 = vpop.f32.mrb[0].mxu0
        %v1251 = vadd.f32 0.0, %v1250
        %v1252 = vpop.f32.mrb[0].mxu0
        %1253 = vdwg.mxu0
        %v1254 = vsel %vm874, %v1248, -inf
        %1255 = vmax.xlane.f32.xlu0 %v1254
        %v1256 = vpop.xlane.xlu0 %1255
        %v1257 = vsel %vm874, %v1251, -inf
        %1258 = vmax.xlane.f32.xlu0 %v1257
        %v1259 = vpop.xlane.xlu0 %1258
        %v1260 = vsub.f32 %v1248, %v1256
        %v1261 = vsub.f32 %v1251, %v1259
        %v1262 = vmul.f32 %v1260, 1.442695
        %v1263 = vpow.pop %v1262
        %v1264 = vmul.f32 %v1261, 1.442695
        %v1265 = vpow.pop %v1264
        %v1266 = vsel %vm874, %v1263, 0.0
        %1267 = vadd.xlane.f32.xlu0 %v1266
        %v1268 = vpop.xlane.xlu0 %1267
        %v1269 = vsel %vm874, %v1265, 0.0
        %1270 = vadd.xlane.f32.xlu0 %v1269
        %v1271 = vpop.xlane.xlu0 %1270
        %v1272 = vrcp.pop %v1268
        %v1273 = vrcp.pop %v1271
        %v1274 = vmul.f32 %v1263, %v1272
        %v1275 = vmul.f32 %v1265, %v1273
        %v1276 = vpack.c.bf16 %v1275, %v1274
        %1277 = vrot.lane.b32.xlu0 %v825, 32
        %v1278 = vpop.permute.xlu0 %1277
        %v1281 = vsel %vm874, %v1276, 0
        %1283 = vmatprep.subr.bf16.mxu0 0
        %1284 = vmatpush1.bf16.msra.mxu0 %v1278
        %1285 = vmatprep.subr.bf16.mxu0 0
        %1286 = vmatpush1.bf16.msra.mxu0 0
        %1287 = vmatprep.subr.bf16.mxu0 0
        %1288 = vmatpush1.bf16.msra.mxu0 0
        %1289 = vmatprep.subr.bf16.mxu0 0
        %1290 = vmatpush1.bf16.msra.mxu0 0
        %1291 = vmatprep.subr.bf16.mxu0 0
        %1292 = vmatpush1.bf16.msra.mxu0 0
        %1293 = vmatprep.subr.bf16.mxu0 0
        %1294 = vmatpush1.bf16.msra.mxu0 0
        %1295 = vmatprep.subr.bf16.mxu0 0
        %1296 = vmatpush1.bf16.msra.mxu0 0
        %1297 = vmatprep.subr.bf16.mxu0 0
        %1298 = vmatpush1.bf16.msra.mxu0 0
        %1299 = vmatprep.subr.bf16.mxu0 0
        %1300 = vmatpush1.bf16.msra.mxu0 0
        %1301 = vmatprep.subr.bf16.mxu0 0
        %1302 = vmatpush1.bf16.msra.mxu0 0
        %1303 = vmatprep.subr.bf16.mxu0 0
        %1304 = vmatpush1.bf16.msra.mxu0 0
        %1305 = vmatprep.subr.bf16.mxu0 0
        %1306 = vmatpush1.bf16.msra.mxu0 0
        %1307 = vmatprep.subr.bf16.mxu0 0
        %1308 = vmatpush1.bf16.msra.mxu0 0
        %1309 = vmatprep.subr.bf16.mxu0 0
        %1310 = vmatpush1.bf16.msra.mxu0 0
        %1311 = vmatprep.subr.bf16.mxu0 0
        %1312 = vmatpush1.bf16.msra.mxu0 0
        %1313 = vmatprep.subr.bf16.mxu0 0
        %1314 = vmatpush1.bf16.msra.mxu0 0
        %1315 = vmatprep.mubr.bf16.mxu0 0
        %1316 = vmatmul.mubr.bf16.gmra.mrb[0].mxu0 %v1281
        %v1317 = vpop.f32.mrb[0].mxu0
        %v1318 = vadd.f32 0.0, %v1317
        %v1319 = vpop.f32.mrb[0].mxu0
        %v1320 = vpop.f32.mrb[0].mxu0
        %v1321 = vadd.f32 0.0, %v1320
        %v1322 = vpop.f32.mrb[0].mxu0
        %1323 = vdwg.mxu0
        %v1324 = vpack.c.bf16 %v1321, %v1318
        %1326 = vrot.lane.b32.xlu0 %v1324, 96
        %v1327 = vpop.permute.xlu0 %1326
        %vm1329 = vcmask 1048320
        %1330 = vst.msk [vmem:[#allocation2] sm:$0xff] %vm1329, %v1327
        %v1331 = vld [vmem:[#allocation2] sm:$0xff]
        %v1332 = vld [vmem:[#allocation8] sm:$0xf]
        %v1333 = vld [vmem:[#allocation8 + $0x4] sm:$0xf]
        %v1334 = vld [vmem:[#allocation8 + $0x8] sm:$0xf]
        %v1335 = vld [vmem:[#allocation8 + $0xc] sm:$0xf]
        %v1336 = vld [vmem:[#allocation8 + $0x10] sm:$0xf]
        %v1337 = vld [vmem:[#allocation8 + $0x14] sm:$0xf]
        %v1338 = vld [vmem:[#allocation8 + $0x18] sm:$0xf]
        %v1339 = vld [vmem:[#allocation8 + $0x1c] sm:$0xf]
        %v1340 = vld [vmem:[#allocation8 + $0x20] sm:$0xf]
        %v1341 = vld [vmem:[#allocation8 + $0x24] sm:$0xf]
        %v1342 = vld [vmem:[#allocation8 + $0x28] sm:$0xf]
        %v1343 = vld [vmem:[#allocation8 + $0x2c] sm:$0xf]
        %v1344 = vld [vmem:[#allocation8 + $0x30] sm:$0xf]
        %v1345 = vld [vmem:[#allocation8 + $0x34] sm:$0xf]
        %v1346 = vld [vmem:[#allocation8 + $0x38] sm:$0xf]
        %v1347 = vld [vmem:[#allocation8 + $0x3c] sm:$0xf]
        %v1348 = vld [vmem:[%s4] sm:$0x1]
        %v1350 = vlaneseq
        %v1351 = vshrl.u32 %v1350, 7
        %v1352 = vsub.s32 0, %v1351
        %v1353 = vrot.slane %v1348, %v1352
        %v1371 = vunpack.c.l.b16 %v1332
        %v1372 = vunpack.c.l.b16 %v1333
        %v1373 = vunpack.c.l.b16 %v1334
        %v1374 = vunpack.c.l.b16 %v1335
        %v1375 = vunpack.c.l.b16 %v1336
        %v1376 = vunpack.c.l.b16 %v1337
        %v1377 = vunpack.c.l.b16 %v1338
        %v1378 = vunpack.c.l.b16 %v1339
        %v1379 = vunpack.c.l.b16 %v1340
        %v1380 = vunpack.c.l.b16 %v1341
        %v1381 = vunpack.c.l.b16 %v1342
        %v1382 = vunpack.c.l.b16 %v1343
        %v1383 = vunpack.c.l.b16 %v1344
        %v1384 = vunpack.c.l.b16 %v1345
        %v1385 = vunpack.c.l.b16 %v1346
        %v1386 = vunpack.c.l.b16 %v1347
        %v1387 = vpack.c.b16 %v1372, %v1371
        %v1388 = vpack.c.b16 %v1374, %v1373
        %v1389 = vpack.c.b16 %v1376, %v1375
        %v1390 = vpack.c.b16 %v1378, %v1377
        %v1391 = vpack.c.b16 %v1380, %v1379
        %v1392 = vpack.c.b16 %v1382, %v1381
        %v1393 = vpack.c.b16 %v1384, %v1383
        %v1394 = vpack.c.b16 %v1386, %v1385
        %1403 = vmatprep.subr.bf16.mxu0 0
        %1404 = vmatpush1.bf16.msra.mxu0 %v1387
        %1405 = vmatprep.subr.bf16.mxu0 0
        %1406 = vmatpush1.bf16.msra.mxu0 %v1388
        %1407 = vmatprep.subr.bf16.mxu0 0
        %1408 = vmatpush1.bf16.msra.mxu0 %v1389
        %1409 = vmatprep.subr.bf16.mxu0 0
        %1410 = vmatpush1.bf16.msra.mxu0 %v1390
        %1411 = vmatprep.subr.bf16.mxu0 0
        %1412 = vmatpush1.bf16.msra.mxu0 %v1391
        %1413 = vmatprep.subr.bf16.mxu0 0
        %1414 = vmatpush1.bf16.msra.mxu0 %v1392
        %1415 = vmatprep.subr.bf16.mxu0 0
        %1416 = vmatpush1.bf16.msra.mxu0 %v1393
        %1417 = vmatprep.subr.bf16.mxu0 0
        %1418 = vmatpush1.bf16.msra.mxu0 %v1394
        %1419 = vmatprep.subr.bf16.mxu0 0
        %1420 = vmatpush1.bf16.msra.mxu0 0
        %1421 = vmatprep.subr.bf16.mxu0 0
        %1422 = vmatpush1.bf16.msra.mxu0 0
        %1423 = vmatprep.subr.bf16.mxu0 0
        %1424 = vmatpush1.bf16.msra.mxu0 0
        %1425 = vmatprep.subr.bf16.mxu0 0
        %1426 = vmatpush1.bf16.msra.mxu0 0
        %1427 = vmatprep.subr.bf16.mxu0 0
        %1428 = vmatpush1.bf16.msra.mxu0 0
        %1429 = vmatprep.subr.bf16.mxu0 0
        %1430 = vmatpush1.bf16.msra.mxu0 0
        %1431 = vmatprep.subr.bf16.mxu0 0
        %1432 = vmatpush1.bf16.msra.mxu0 0
        %1433 = vmatprep.subr.bf16.mxu0 0
        %1434 = vmatpush1.bf16.msra.mxu0 0
        %1435 = vmatprep.mubr.bf16.mxu0 0
        %1436 = vmatmul.mubr.bf16.gmra.mrb[0].mxu0 %v1331
        %v1437 = vpop.f32.mrb[0].mxu0
        %v1438 = vadd.f32 %v1353, %v1437
        %v1439 = vpop.f32.mrb[0].mxu0
        %v1440 = vpop.f32.mrb[0].mxu0
        %v1441 = vadd.f32 %v1353, %v1440
        %v1442 = vpop.f32.mrb[0].mxu0
        %1443 = vdwg.mxu0
        %v1444 = vadd.f32 %v518, %v1438
        %v1445 = vadd.f32 %v519, %v1441
        %v1446 = vld [vmem:[%s7] sm:$0x1]
        %v1447 = vld [vmem:[%s8] sm:$0x1]
        %1448 = vadd.xlane.f32.xlu0 %v1444
        %v1449 = vpop.xlane.xlu0 %1448
        %1450 = vadd.xlane.f32.xlu0 %v1445
        %v1451 = vpop.xlane.xlu0 %1450
        %v1452 = vmul.f32 %v1449, %v526
        %v1453 = vmul.f32 %v1451, %v526
        %v1454 = vsub.f32 %v1444, %v1452
        %v1455 = vsub.f32 %v1445, %v1453
        %v1456 = vmul.f32 %v1454, %v1454
        %v1457 = vmul.f32 %v1455, %v1455
        %1458 = vadd.xlane.f32.xlu0 %v1456
        %v1459 = vpop.xlane.xlu0 %1458
        %1460 = vadd.xlane.f32.xlu0 %v1457
        %v1461 = vpop.xlane.xlu0 %1460
        %v1462 = vmul.f32 %v1459, %v526
        %v1463 = vmul.f32 %v1461, %v526
        %v1464 = vadd.f32 %v1462, 1e-05
        %v1465 = vadd.f32 %v1463, 1e-05
        %v1466 = vrsqrt.pop %v1464
        %v1467 = vrsqrt.pop %v1465
        %v1468 = vmul.f32 %v1454, %v1466
        %v1469 = vmul.f32 %v1455, %v1467
        %v1471 = vlaneseq
        %v1472 = vshrl.u32 %v1471, 7
        %v1473 = vsub.s32 0, %v1472
        %v1474 = vrot.slane %v1446, %v1473
        %v1476 = vmul.f32 %v1468, %v1474
        %v1477 = vmul.f32 %v1469, %v1474
        %v1479 = vlaneseq
        %v1480 = vshrl.u32 %v1479, 7
        %v1481 = vsub.s32 0, %v1480
        %v1482 = vrot.slane %v1447, %v1481
        %v1484 = vadd.f32 %v1476, %v1482
        %v1485 = vadd.f32 %v1477, %v1482
        %v1486 = vpack.c.bf16 %v1485, %v1484
        %v1487 = vld [vmem:[#allocation9] sm:$0xff]
        %v1488 = vld [vmem:[#allocation9 + $0x8] sm:$0xff]
        %v1489 = vld [vmem:[#allocation9 + $0x10] sm:$0xff]
        %v1490 = vld [vmem:[#allocation9 + $0x18] sm:$0xff]
        %v1491 = vld [vmem:[#allocation9 + $0x20] sm:$0xff]
        %v1492 = vld [vmem:[#allocation9 + $0x28] sm:$0xff]
        %v1493 = vld [vmem:[#allocation9 + $0x30] sm:$0xff]
        %v1494 = vld [vmem:[#allocation9 + $0x38] sm:$0xff]
        %v1495 = vld [vmem:[#allocation9 + $0x40] sm:$0xff]
        %v1496 = vld [vmem:[#allocation9 + $0x48] sm:$0xff]
        %v1497 = vld [vmem:[#allocation9 + $0x50] sm:$0xff]
        %v1498 = vld [vmem:[#allocation9 + $0x58] sm:$0xff]
        %v1499 = vld [vmem:[#allocation9 + $0x60] sm:$0xff]
        %v1500 = vld [vmem:[#allocation9 + $0x68] sm:$0xff]
        %v1501 = vld [vmem:[#allocation9 + $0x70] sm:$0xff]
        %v1502 = vld [vmem:[#allocation9 + $0x78] sm:$0xff]
        %v1503 = vld [vmem:[#allocation9 + $0x80] sm:$0xff]
        %v1504 = vld [vmem:[#allocation9 + $0x88] sm:$0xff]
        %v1505 = vld [vmem:[#allocation9 + $0x90] sm:$0xff]
        %v1506 = vld [vmem:[#allocation9 + $0x98] sm:$0xff]
        %v1507 = vld [vmem:[#allocation9 + $0xa0] sm:$0xff]
        %v1508 = vld [vmem:[#allocation9 + $0xa8] sm:$0xff]
        %v1509 = vld [vmem:[#allocation9 + $0xb0] sm:$0xff]
        %v1510 = vld [vmem:[#allocation9 + $0xb8] sm:$0xff]
        %v1511 = vld [vmem:[#allocation9 + $0xc0] sm:$0xff]
        %v1512 = vld [vmem:[#allocation9 + $0xc8] sm:$0xff]
        %v1513 = vld [vmem:[#allocation9 + $0xd0] sm:$0xff]
        %v1514 = vld [vmem:[#allocation9 + $0xd8] sm:$0xff]
        %v1515 = vld [vmem:[#allocation9 + $0xe0] sm:$0xff]
        %v1516 = vld [vmem:[#allocation9 + $0xe8] sm:$0xff]
        %v1517 = vld [vmem:[#allocation9 + $0xf0] sm:$0xff]
        %v1518 = vld [vmem:[#allocation9 + $0xf8] sm:$0xff]
        %v1519 = vld [vmem:[%s10] sm:$0xf]
        %v1521 = vlaneseq
        %v1522 = vshrl.u32 %v1521, 7
        %v1523 = vsub.s32 0, %v1522
        %v1524 = vrot.slane %v1519, %v1523
        %v1525 = vlaneseq
        %v1526 = vshrl.u32 %v1525, 7
        %v1527 = vsub.s32 1, %v1526
        %v1528 = vrot.slane %v1519, %v1527
        %v1529 = vlaneseq
        %v1530 = vshrl.u32 %v1529, 7
        %v1531 = vsub.s32 2, %v1530
        %v1532 = vrot.slane %v1519, %v1531
        %v1533 = vlaneseq
        %v1534 = vshrl.u32 %v1533, 7
        %v1535 = vsub.s32 3, %v1534
        %v1536 = vrot.slane %v1519, %v1535
        %v1573 = vunpack.c.l.b16 %v1487
        %v1574 = vunpack.c.h.b16 %v1487
        %v1575 = vunpack.c.l.b16 %v1488
        %v1576 = vunpack.c.h.b16 %v1488
        %v1577 = vunpack.c.l.b16 %v1489
        %v1578 = vunpack.c.h.b16 %v1489
        %v1579 = vunpack.c.l.b16 %v1490
        %v1580 = vunpack.c.h.b16 %v1490
        %v1581 = vunpack.c.l.b16 %v1491
        %v1582 = vunpack.c.h.b16 %v1491
        %v1583 = vunpack.c.l.b16 %v1492
        %v1584 = vunpack.c.h.b16 %v1492
        %v1585 = vunpack.c.l.b16 %v1493
        %v1586 = vunpack.c.h.b16 %v1493
        %v1587 = vunpack.c.l.b16 %v1494
        %v1588 = vunpack.c.h.b16 %v1494
        %v1589 = vunpack.c.l.b16 %v1495
        %v1590 = vunpack.c.h.b16 %v1495
        %v1591 = vunpack.c.l.b16 %v1496
        %v1592 = vunpack.c.h.b16 %v1496
        %v1593 = vunpack.c.l.b16 %v1497
        %v1594 = vunpack.c.h.b16 %v1497
        %v1595 = vunpack.c.l.b16 %v1498
        %v1596 = vunpack.c.h.b16 %v1498
        %v1597 = vunpack.c.l.b16 %v1499
        %v1598 = vunpack.c.h.b16 %v1499
        %v1599 = vunpack.c.l.b16 %v1500
        %v1600 = vunpack.c.h.b16 %v1500
        %v1601 = vunpack.c.l.b16 %v1501
        %v1602 = vunpack.c.h.b16 %v1501
        %v1603 = vunpack.c.l.b16 %v1502
        %v1604 = vunpack.c.h.b16 %v1502
        %v1605 = vunpack.c.l.b16 %v1503
        %v1606 = vunpack.c.h.b16 %v1503
        %v1607 = vunpack.c.l.b16 %v1504
        %v1608 = vunpack.c.h.b16 %v1504
        %v1609 = vunpack.c.l.b16 %v1505
        %v1610 = vunpack.c.h.b16 %v1505
        %v1611 = vunpack.c.l.b16 %v1506
        %v1612 = vunpack.c.h.b16 %v1506
        %v1613 = vunpack.c.l.b16 %v1507
        %v1614 = vunpack.c.h.b16 %v1507
        %v1615 = vunpack.c.l.b16 %v1508
        %v1616 = vunpack.c.h.b16 %v1508
        %v1617 = vunpack.c.l.b16 %v1509
        %v1618 = vunpack.c.h.b16 %v1509
        %v1619 = vunpack.c.l.b16 %v1510
        %v1620 = vunpack.c.h.b16 %v1510
        %v1621 = vunpack.c.l.b16 %v1511
        %v1622 = vunpack.c.h.b16 %v1511
        %v1623 = vunpack.c.l.b16 %v1512
        %v1624 = vunpack.c.h.b16 %v1512
        %v1625 = vunpack.c.l.b16 %v1513
        %v1626 = vunpack.c.h.b16 %v1513
        %v1627 = vunpack.c.l.b16 %v1514
        %v1628 = vunpack.c.h.b16 %v1514
        %v1629 = vunpack.c.l.b16 %v1515
        %v1630 = vunpack.c.h.b16 %v1515
        %v1631 = vunpack.c.l.b16 %v1516
        %v1632 = vunpack.c.h.b16 %v1516
        %v1633 = vunpack.c.l.b16 %v1517
        %v1634 = vunpack.c.h.b16 %v1517
        %v1635 = vunpack.c.l.b16 %v1518
        %v1636 = vunpack.c.h.b16 %v1518
        %v1637 = vpack.c.b16 %v1577, %v1573
        %v1638 = vpack.c.b16 %v1578, %v1574
        %v1639 = vpack.c.b16 %v1579, %v1575
        %v1640 = vpack.c.b16 %v1580, %v1576
        %v1641 = vpack.c.b16 %v1585, %v1581
        %v1642 = vpack.c.b16 %v1586, %v1582
        %v1643 = vpack.c.b16 %v1587, %v1583
        %v1644 = vpack.c.b16 %v1588, %v1584
        %v1645 = vpack.c.b16 %v1593, %v1589
        %v1646 = vpack.c.b16 %v1594, %v1590
        %v1647 = vpack.c.b16 %v1595, %v1591
        %v1648 = vpack.c.b16 %v1596, %v1592
        %v1649 = vpack.c.b16 %v1601, %v1597
        %v1650 = vpack.c.b16 %v1602, %v1598
        %v1651 = vpack.c.b16 %v1603, %v1599
        %v1652 = vpack.c.b16 %v1604, %v1600
        %v1653 = vpack.c.b16 %v1609, %v1605
        %v1654 = vpack.c.b16 %v1610, %v1606
        %v1655 = vpack.c.b16 %v1611, %v1607
        %v1656 = vpack.c.b16 %v1612, %v1608
        %v1657 = vpack.c.b16 %v1617, %v1613
        %v1658 = vpack.c.b16 %v1618, %v1614
        %v1659 = vpack.c.b16 %v1619, %v1615
        %v1660 = vpack.c.b16 %v1620, %v1616
        %v1661 = vpack.c.b16 %v1625, %v1621
        %v1662 = vpack.c.b16 %v1626, %v1622
        %v1663 = vpack.c.b16 %v1627, %v1623
        %v1664 = vpack.c.b16 %v1628, %v1624
        %v1665 = vpack.c.b16 %v1633, %v1629
        %v1666 = vpack.c.b16 %v1634, %v1630
        %v1667 = vpack.c.b16 %v1635, %v1631
        %v1668 = vpack.c.b16 %v1636, %v1632
        %1701 = vmatprep.subr.bf16.mxu0 %v1638
        %1702 = vmatpush1.bf16.msra.mxu0 %v1637
        %1703 = vmatprep.subr.bf16.mxu0 %v1642
        %1704 = vmatpush1.bf16.msra.mxu0 %v1641
        %1705 = vmatprep.subr.bf16.mxu0 %v1646
        %1706 = vmatpush1.bf16.msra.mxu0 %v1645
        %1707 = vmatprep.subr.bf16.mxu0 %v1650
        %1708 = vmatpush1.bf16.msra.mxu0 %v1649
        %1709 = vmatprep.subr.bf16.mxu0 %v1654
        %1710 = vmatpush1.bf16.msra.mxu0 %v1653
        %1711 = vmatprep.subr.bf16.mxu0 %v1658
        %1712 = vmatpush1.bf16.msra.mxu0 %v1657
        %1713 = vmatprep.subr.bf16.mxu0 %v1662
        %1714 = vmatpush1.bf16.msra.mxu0 %v1661
        %1715 = vmatprep.subr.bf16.mxu0 %v1666
        %1716 = vmatpush1.bf16.msra.mxu0 %v1665
        %1717 = vmatprep.subr.bf16.mxu0 0
        %1718 = vmatpush1.bf16.msra.mxu0 0
        %1719 = vmatprep.subr.bf16.mxu0 0
        %1720 = vmatpush1.bf16.msra.mxu0 0
        %1721 = vmatprep.subr.bf16.mxu0 0
        %1722 = vmatpush1.bf16.msra.mxu0 0
        %1723 = vmatprep.subr.bf16.mxu0 0
        %1724 = vmatpush1.bf16.msra.mxu0 0
        %1725 = vmatprep.subr.bf16.mxu0 0
        %1726 = vmatpush1.bf16.msra.mxu0 0
        %1727 = vmatprep.subr.bf16.mxu0 0
        %1728 = vmatpush1.bf16.msra.mxu0 0
        %1729 = vmatprep.subr.bf16.mxu0 0
        %1730 = vmatpush1.bf16.msra.mxu0 0
        %1731 = vmatprep.subr.bf16.mxu0 0
        %1732 = vmatpush1.bf16.msra.mxu0 0
        %1733 = vmatprep.mubr.bf16.mxu0 0
        %1734 = vmatmul.mubr.bf16.gmra.mrb[0].mxu0 %v1486
        %v1735 = vpop.f32.mrb[0].mxu0
        %v1736 = vadd.f32 %v1524, %v1735
        %v1737 = vpop.f32.mrb[0].mxu0
        %v1738 = vadd.f32 %v1528, %v1737
        %v1739 = vpop.f32.mrb[0].mxu0
        %v1740 = vadd.f32 %v1524, %v1739
        %v1741 = vpop.f32.mrb[0].mxu0
        %v1742 = vadd.f32 %v1528, %v1741
        %1743 = vdwg.mxu0
        %1744 = vmatprep.subr.bf16.mxu0 %v1640
        %1745 = vmatpush1.bf16.msra.mxu0 %v1639
        %1746 = vmatprep.subr.bf16.mxu0 %v1644
        %1747 = vmatpush1.bf16.msra.mxu0 %v1643
        %1748 = vmatprep.subr.bf16.mxu0 %v1648
        %1749 = vmatpush1.bf16.msra.mxu0 %v1647
        %1750 = vmatprep.subr.bf16.mxu0 %v1652
        %1751 = vmatpush1.bf16.msra.mxu0 %v1651
        %1752 = vmatprep.subr.bf16.mxu0 %v1656
        %1753 = vmatpush1.bf16.msra.mxu0 %v1655
        %1754 = vmatprep.subr.bf16.mxu0 %v1660
        %1755 = vmatpush1.bf16.msra.mxu0 %v1659
        %1756 = vmatprep.subr.bf16.mxu0 %v1664
        %1757 = vmatpush1.bf16.msra.mxu0 %v1663
        %1758 = vmatprep.subr.bf16.mxu0 %v1668
        %1759 = vmatpush1.bf16.msra.mxu0 %v1667
        %1760 = vmatprep.subr.bf16.mxu0 0
        %1761 = vmatpush1.bf16.msra.mxu0 0
        %1762 = vmatprep.subr.bf16.mxu0 0
        %1763 = vmatpush1.bf16.msra.mxu0 0
        %1764 = vmatprep.subr.bf16.mxu0 0
        %1765 = vmatpush1.bf16.msra.mxu0 0
        %1766 = vmatprep.subr.bf16.mxu0 0
        %1767 = vmatpush1.bf16.msra.mxu0 0
        %1768 = vmatprep.subr.bf16.mxu0 0
        %1769 = vmatpush1.bf16.msra.mxu0 0
        %1770 = vmatprep.subr.bf16.mxu0 0
        %1771 = vmatpush1.bf16.msra.mxu0 0
        %1772 = vmatprep.subr.bf16.mxu0 0
        %1773 = vmatpush1.bf16.msra.mxu0 0
        %1774 = vmatprep.subr.bf16.mxu0 0
        %1775 = vmatpush1.bf16.msra.mxu0 0
        %1776 = vmatprep.mubr.bf16.mxu0 0
        %1777 = vmatmul.mubr.bf16.gmra.mrb[0].mxu0 %v1486
        %v1778 = vpop.f32.mrb[0].mxu0
        %v1779 = vadd.f32 %v1532, %v1778
        %v1780 = vpop.f32.mrb[0].mxu0
        %v1781 = vadd.f32 %v1536, %v1780
        %v1782 = vpop.f32.mrb[0].mxu0
        %v1783 = vadd.f32 %v1532, %v1782
        %v1784 = vpop.f32.mrb[0].mxu0
        %v1785 = vadd.f32 %v1536, %v1784
        %1786 = vdwg.mxu0
        %v1787 = vmul.f32 %v1736, 1.702
        %v1788 = vmul.f32 %v1738, 1.702
        %v1789 = vmul.f32 %v1779, 1.702
        %v1790 = vmul.f32 %v1781, 1.702
        %v1791 = vmul.f32 %v1740, 1.702
        %v1792 = vmul.f32 %v1742, 1.702
        %v1793 = vmul.f32 %v1783, 1.702
        %v1794 = vmul.f32 %v1785, 1.702
        %v1795 = vxor.u32 %v1787, 2147483648
        %v1796 = vxor.u32 %v1788, 2147483648
        %v1797 = vxor.u32 %v1789, 2147483648
        %v1798 = vxor.u32 %v1790, 2147483648
        %v1799 = vxor.u32 %v1791, 2147483648
        %v1800 = vxor.u32 %v1792, 2147483648
        %v1801 = vxor.u32 %v1793, 2147483648
        %v1802 = vxor.u32 %v1794, 2147483648
        %v1803 = vmul.f32 %v1795, 1.442695
        %v1804 = vpow.pop %v1803
        %v1805 = vmul.f32 %v1796, 1.442695
        %v1806 = vpow.pop %v1805
        %v1807 = vmul.f32 %v1797, 1.442695
        %v1808 = vpow.pop %v1807
        %v1809 = vmul.f32 %v1798, 1.442695
        %v1810 = vpow.pop %v1809
        %v1811 = vmul.f32 %v1799, 1.442695
        %v1812 = vpow.pop %v1811
        %v1813 = vmul.f32 %v1800, 1.442695
        %v1814 = vpow.pop %v1813
        %v1815 = vmul.f32 %v1801, 1.442695
        %v1816 = vpow.pop %v1815
        %v1817 = vmul.f32 %v1802, 1.442695
        %v1818 = vpow.pop %v1817
        %v1819 = vadd.f32 %v1804, 1.0
        %v1820 = vadd.f32 %v1806, 1.0
        %v1821 = vadd.f32 %v1808, 1.0
        %v1822 = vadd.f32 %v1810, 1.0
        %v1823 = vadd.f32 %v1812, 1.0
        %v1824 = vadd.f32 %v1814, 1.0
        %v1825 = vadd.f32 %v1816, 1.0
        %v1826 = vadd.f32 %v1818, 1.0
        %v1827 = vrcp.pop %v1819
        %v1828 = vmul.f32 1.0, %v1827
        %v1829 = vrcp.pop %v1820
        %v1830 = vmul.f32 1.0, %v1829
        %v1831 = vrcp.pop %v1821
        %v1832 = vmul.f32 1.0, %v1831
        %v1833 = vrcp.pop %v1822
        %v1834 = vmul.f32 1.0, %v1833
        %v1835 = vrcp.pop %v1823
        %v1836 = vmul.f32 1.0, %v1835
        %v1837 = vrcp.pop %v1824
        %v1838 = vmul.f32 1.0, %v1837
        %v1839 = vrcp.pop %v1825
        %v1840 = vmul.f32 1.0, %v1839
        %v1841 = vrcp.pop %v1826
        %v1842 = vmul.f32 1.0, %v1841
        %v1843 = vmul.f32 %v1736, %v1828
        %v1844 = vmul.f32 %v1738, %v1830
        %v1845 = vmul.f32 %v1779, %v1832
        %v1846 = vmul.f32 %v1781, %v1834
        %v1847 = vmul.f32 %v1740, %v1836
        %v1848 = vmul.f32 %v1742, %v1838
        %v1849 = vmul.f32 %v1783, %v1840
        %v1850 = vmul.f32 %v1785, %v1842
        %v1851 = vpack.c.bf16 %v1847, %v1843
        %v1852 = vpack.c.bf16 %v1848, %v1844
        %v1853 = vpack.c.bf16 %v1849, %v1845
        %v1854 = vpack.c.bf16 %v1850, %v1846
        %v1855 = vld [vmem:[#allocation11] sm:$0xf]
        %v1856 = vld [vmem:[#allocation11 + $0x4] sm:$0xf]
        %v1857 = vld [vmem:[#allocation11 + $0x8] sm:$0xf]
        %v1858 = vld [vmem:[#allocation11 + $0xc] sm:$0xf]
        %v1859 = vld [vmem:[#allocation11 + $0x10] sm:$0xf]
        %v1860 = vld [vmem:[#allocation11 + $0x14] sm:$0xf]
        %v1861 = vld [vmem:[#allocation11 + $0x18] sm:$0xf]
        %v1862 = vld [vmem:[#allocation11 + $0x1c] sm:$0xf]
        %v1863 = vld [vmem:[#allocation11 + $0x20] sm:$0xf]
        %v1864 = vld [vmem:[#allocation11 + $0x24] sm:$0xf]
        %v1865 = vld [vmem:[#allocation11 + $0x28] sm:$0xf]
        %v1866 = vld [vmem:[#allocation11 + $0x2c] sm:$0xf]
        %v1867 = vld [vmem:[#allocation11 + $0x30] sm:$0xf]
        %v1868 = vld [vmem:[#allocation11 + $0x34] sm:$0xf]
        %v1869 = vld [vmem:[#allocation11 + $0x38] sm:$0xf]
        %v1870 = vld [vmem:[#allocation11 + $0x3c] sm:$0xf]
        %v1871 = vld [vmem:[#allocation11 + $0x40] sm:$0xf]
        %v1872 = vld [vmem:[#allocation11 + $0x44] sm:$0xf]
        %v1873 = vld [vmem:[#allocation11 + $0x48] sm:$0xf]
        %v1874 = vld [vmem:[#allocation11 + $0x4c] sm:$0xf]
        %v1875 = vld [vmem:[#allocation11 + $0x50] sm:$0xf]
        %v1876 = vld [vmem:[#allocation11 + $0x54] sm:$0xf]
        %v1877 = vld [vmem:[#allocation11 + $0x58] sm:$0xf]
        %v1878 = vld [vmem:[#allocation11 + $0x5c] sm:$0xf]
        %v1879 = vld [vmem:[#allocation11 + $0x60] sm:$0xf]
        %v1880 = vld [vmem:[#allocation11 + $0x64] sm:$0xf]
        %v1881 = vld [vmem:[#allocation11 + $0x68] sm:$0xf]
        %v1882 = vld [vmem:[#allocation11 + $0x6c] sm:$0xf]
        %v1883 = vld [vmem:[#allocation11 + $0x70] sm:$0xf]
        %v1884 = vld [vmem:[#allocation11 + $0x74] sm:$0xf]
        %v1885 = vld [vmem:[#allocation11 + $0x78] sm:$0xf]
        %v1886 = vld [vmem:[#allocation11 + $0x7c] sm:$0xf]
        %v1887 = vld [vmem:[#allocation11 + $0x80] sm:$0xf]
        %v1888 = vld [vmem:[#allocation11 + $0x84] sm:$0xf]
        %v1889 = vld [vmem:[#allocation11 + $0x88] sm:$0xf]
        %v1890 = vld [vmem:[#allocation11 + $0x8c] sm:$0xf]
        %v1891 = vld [vmem:[#allocation11 + $0x90] sm:$0xf]
        %v1892 = vld [vmem:[#allocation11 + $0x94] sm:$0xf]
        %v1893 = vld [vmem:[#allocation11 + $0x98] sm:$0xf]
        %v1894 = vld [vmem:[#allocation11 + $0x9c] sm:$0xf]
        %v1895 = vld [vmem:[#allocation11 + $0xa0] sm:$0xf]
        %v1896 = vld [vmem:[#allocation11 + $0xa4] sm:$0xf]
        %v1897 = vld [vmem:[#allocation11 + $0xa8] sm:$0xf]
        %v1898 = vld [vmem:[#allocation11 + $0xac] sm:$0xf]
        %v1899 = vld [vmem:[#allocation11 + $0xb0] sm:$0xf]
        %v1900 = vld [vmem:[#allocation11 + $0xb4] sm:$0xf]
        %v1901 = vld [vmem:[#allocation11 + $0xb8] sm:$0xf]
        %v1902 = vld [vmem:[#allocation11 + $0xbc] sm:$0xf]
        %v1903 = vld [vmem:[#allocation11 + $0xc0] sm:$0xf]
        %v1904 = vld [vmem:[#allocation11 + $0xc4] sm:$0xf]
        %v1905 = vld [vmem:[#allocation11 + $0xc8] sm:$0xf]
        %v1906 = vld [vmem:[#allocation11 + $0xcc] sm:$0xf]
        %v1907 = vld [vmem:[#allocation11 + $0xd0] sm:$0xf]
        %v1908 = vld [vmem:[#allocation11 + $0xd4] sm:$0xf]
        %v1909 = vld [vmem:[#allocation11 + $0xd8] sm:$0xf]
        %v1910 = vld [vmem:[#allocation11 + $0xdc] sm:$0xf]
        %v1911 = vld [vmem:[#allocation11 + $0xe0] sm:$0xf]
        %v1912 = vld [vmem:[#allocation11 + $0xe4] sm:$0xf]
        %v1913 = vld [vmem:[#allocation11 + $0xe8] sm:$0xf]
        %v1914 = vld [vmem:[#allocation11 + $0xec] sm:$0xf]
        %v1915 = vld [vmem:[#allocation11 + $0xf0] sm:$0xf]
        %v1916 = vld [vmem:[#allocation11 + $0xf4] sm:$0xf]
        %v1917 = vld [vmem:[#allocation11 + $0xf8] sm:$0xf]
        %v1918 = vld [vmem:[#allocation11 + $0xfc] sm:$0xf]
        %v1919 = vld [vmem:[%s12] sm:$0x1]
        %v1921 = vlaneseq
        %v1922 = vshrl.u32 %v1921, 7
        %v1923 = vsub.s32 0, %v1922
        %v1924 = vrot.slane %v1919, %v1923
        %v1990 = vunpack.c.l.b16 %v1855
        %v1991 = vunpack.c.l.b16 %v1856
        %v1992 = vunpack.c.l.b16 %v1857
        %v1993 = vunpack.c.l.b16 %v1858
        %v1994 = vunpack.c.l.b16 %v1859
        %v1995 = vunpack.c.l.b16 %v1860
        %v1996 = vunpack.c.l.b16 %v1861
        %v1997 = vunpack.c.l.b16 %v1862
        %v1998 = vunpack.c.l.b16 %v1863
        %v1999 = vunpack.c.l.b16 %v1864
        %v2000 = vunpack.c.l.b16 %v1865
        %v2001 = vunpack.c.l.b16 %v1866
        %v2002 = vunpack.c.l.b16 %v1867
        %v2003 = vunpack.c.l.b16 %v1868
        %v2004 = vunpack.c.l.b16 %v1869
        %v2005 = vunpack.c.l.b16 %v1870
        %v2006 = vunpack.c.l.b16 %v1871
        %v2007 = vunpack.c.l.b16 %v1872
        %v2008 = vunpack.c.l.b16 %v1873
        %v2009 = vunpack.c.l.b16 %v1874
        %v2010 = vunpack.c.l.b16 %v1875
        %v2011 = vunpack.c.l.b16 %v1876
        %v2012 = vunpack.c.l.b16 %v1877
        %v2013 = vunpack.c.l.b16 %v1878
        %v2014 = vunpack.c.l.b16 %v1879
        %v2015 = vunpack.c.l.b16 %v1880
        %v2016 = vunpack.c.l.b16 %v1881
        %v2017 = vunpack.c.l.b16 %v1882
        %v2018 = vunpack.c.l.b16 %v1883
        %v2019 = vunpack.c.l.b16 %v1884
        %v2020 = vunpack.c.l.b16 %v1885
        %v2021 = vunpack.c.l.b16 %v1886
        %v2022 = vunpack.c.l.b16 %v1887
        %v2023 = vunpack.c.l.b16 %v1888
        %v2024 = vunpack.c.l.b16 %v1889
        %v2025 = vunpack.c.l.b16 %v1890
        %v2026 = vunpack.c.l.b16 %v1891
        %v2027 = vunpack.c.l.b16 %v1892
        %v2028 = vunpack.c.l.b16 %v1893
        %v2029 = vunpack.c.l.b16 %v1894
        %v2030 = vunpack.c.l.b16 %v1895
        %v2031 = vunpack.c.l.b16 %v1896
        %v2032 = vunpack.c.l.b16 %v1897
        %v2033 = vunpack.c.l.b16 %v1898
        %v2034 = vunpack.c.l.b16 %v1899
        %v2035 = vunpack.c.l.b16 %v1900
        %v2036 = vunpack.c.l.b16 %v1901
        %v2037 = vunpack.c.l.b16 %v1902
        %v2038 = vunpack.c.l.b16 %v1903
        %v2039 = vunpack.c.l.b16 %v1904
        %v2040 = vunpack.c.l.b16 %v1905
        %v2041 = vunpack.c.l.b16 %v1906
        %v2042 = vunpack.c.l.b16 %v1907
        %v2043 = vunpack.c.l.b16 %v1908
        %v2044 = vunpack.c.l.b16 %v1909
        %v2045 = vunpack.c.l.b16 %v1910
        %v2046 = vunpack.c.l.b16 %v1911
        %v2047 = vunpack.c.l.b16 %v1912
        %v2048 = vunpack.c.l.b16 %v1913
        %v2049 = vunpack.c.l.b16 %v1914
        %v2050 = vunpack.c.l.b16 %v1915
        %v2051 = vunpack.c.l.b16 %v1916
        %v2052 = vunpack.c.l.b16 %v1917
        %v2053 = vunpack.c.l.b16 %v1918
        %v2054 = vpack.c.b16 %v1991, %v1990
        %v2055 = vpack.c.b16 %v1993, %v1992
        %v2056 = vpack.c.b16 %v1995, %v1994
        %v2057 = vpack.c.b16 %v1997, %v1996
        %v2058 = vpack.c.b16 %v1999, %v1998
        %v2059 = vpack.c.b16 %v2001, %v2000
        %v2060 = vpack.c.b16 %v2003, %v2002
        %v2061 = vpack.c.b16 %v2005, %v2004
        %v2062 = vpack.c.b16 %v2007, %v2006
        %v2063 = vpack.c.b16 %v2009, %v2008
        %v2064 = vpack.c.b16 %v2011, %v2010
        %v2065 = vpack.c.b16 %v2013, %v2012
        %v2066 = vpack.c.b16 %v2015, %v2014
        %v2067 = vpack.c.b16 %v2017, %v2016
        %v2068 = vpack.c.b16 %v2019, %v2018
        %v2069 = vpack.c.b16 %v2021, %v2020
        %v2070 = vpack.c.b16 %v2023, %v2022
        %v2071 = vpack.c.b16 %v2025, %v2024
        %v2072 = vpack.c.b16 %v2027, %v2026
        %v2073 = vpack.c.b16 %v2029, %v2028
        %v2074 = vpack.c.b16 %v2031, %v2030
        %v2075 = vpack.c.b16 %v2033, %v2032
        %v2076 = vpack.c.b16 %v2035, %v2034
        %v2077 = vpack.c.b16 %v2037, %v2036
        %v2078 = vpack.c.b16 %v2039, %v2038
        %v2079 = vpack.c.b16 %v2041, %v2040
        %v2080 = vpack.c.b16 %v2043, %v2042
        %v2081 = vpack.c.b16 %v2045, %v2044
        %v2082 = vpack.c.b16 %v2047, %v2046
        %v2083 = vpack.c.b16 %v2049, %v2048
        %v2084 = vpack.c.b16 %v2051, %v2050
        %v2085 = vpack.c.b16 %v2053, %v2052
        %2118 = vmatprep.subr.bf16.mxu0 0
        %2119 = vmatpush1.bf16.msra.mxu0 %v2054
        %2120 = vmatprep.subr.bf16.mxu0 0
        %2121 = vmatpush1.bf16.msra.mxu0 %v2055
        %2122 = vmatprep.subr.bf16.mxu0 0
        %2123 = vmatpush1.bf16.msra.mxu0 %v2056
        %2124 = vmatprep.subr.bf16.mxu0 0
        %2125 = vmatpush1.bf16.msra.mxu0 %v2057
        %2126 = vmatprep.subr.bf16.mxu0 0
        %2127 = vmatpush1.bf16.msra.mxu0 %v2058
        %2128 = vmatprep.subr.bf16.mxu0 0
        %2129 = vmatpush1.bf16.msra.mxu0 %v2059
        %2130 = vmatprep.subr.bf16.mxu0 0
        %2131 = vmatpush1.bf16.msra.mxu0 %v2060
        %2132 = vmatprep.subr.bf16.mxu0 0
        %2133 = vmatpush1.bf16.msra.mxu0 %v2061
        %2134 = vmatprep.subr.bf16.mxu0 0
        %2135 = vmatpush1.bf16.msra.mxu0 %v2062
        %2136 = vmatprep.subr.bf16.mxu0 0
        %2137 = vmatpush1.bf16.msra.mxu0 %v2063
        %2138 = vmatprep.subr.bf16.mxu0 0
        %2139 = vmatpush1.bf16.msra.mxu0 %v2064
        %2140 = vmatprep.subr.bf16.mxu0 0
        %2141 = vmatpush1.bf16.msra.mxu0 %v2065
        %2142 = vmatprep.subr.bf16.mxu0 0
        %2143 = vmatpush1.bf16.msra.mxu0 %v2066
        %2144 = vmatprep.subr.bf16.mxu0 0
        %2145 = vmatpush1.bf16.msra.mxu0 %v2067
        %2146 = vmatprep.subr.bf16.mxu0 0
        %2147 = vmatpush1.bf16.msra.mxu0 %v2068
        %2148 = vmatprep.subr.bf16.mxu0 0
        %2149 = vmatpush1.bf16.msra.mxu0 %v2069
        %2150 = vmatprep.mubr.bf16.mxu0 %v1852
        %2151 = vmatmul.mubr.bf16.gmra.mrb[0].mxu0 %v1851
        %v2152 = vpop.f32.mrb[0].mxu0
        %v2153 = vadd.f32 %v1924, %v2152
        %v2154 = vpop.f32.mrb[0].mxu0
        %v2155 = vpop.f32.mrb[0].mxu0
        %v2156 = vadd.f32 %v1924, %v2155
        %v2157 = vpop.f32.mrb[0].mxu0
        %2158 = vdwg.mxu0
        %2159 = vmatprep.subr.bf16.mxu0 0
        %2160 = vmatpush1.bf16.msra.mxu0 %v2070
        %2161 = vmatprep.subr.bf16.mxu0 0
        %2162 = vmatpush1.bf16.msra.mxu0 %v2071
        %2163 = vmatprep.subr.bf16.mxu0 0
        %2164 = vmatpush1.bf16.msra.mxu0 %v2072
        %2165 = vmatprep.subr.bf16.mxu0 0
        %2166 = vmatpush1.bf16.msra.mxu0 %v2073
        %2167 = vmatprep.subr.bf16.mxu0 0
        %2168 = vmatpush1.bf16.msra.mxu0 %v2074
        %2169 = vmatprep.subr.bf16.mxu0 0
        %2170 = vmatpush1.bf16.msra.mxu0 %v2075
        %2171 = vmatprep.subr.bf16.mxu0 0
        %2172 = vmatpush1.bf16.msra.mxu0 %v2076
        %2173 = vmatprep.subr.bf16.mxu0 0
        %2174 = vmatpush1.bf16.msra.mxu0 %v2077
        %2175 = vmatprep.subr.bf16.mxu0 0
        %2176 = vmatpush1.bf16.msra.mxu0 %v2078
        %2177 = vmatprep.subr.bf16.mxu0 0
        %2178 = vmatpush1.bf16.msra.mxu0 %v2079
        %2179 = vmatprep.subr.bf16.mxu0 0
        %2180 = vmatpush1.bf16.msra.mxu0 %v2080
        %2181 = vmatprep.subr.bf16.mxu0 0
        %2182 = vmatpush1.bf16.msra.mxu0 %v2081
        %2183 = vmatprep.subr.bf16.mxu0 0
        %2184 = vmatpush1.bf16.msra.mxu0 %v2082
        %2185 = vmatprep.subr.bf16.mxu0 0
        %2186 = vmatpush1.bf16.msra.mxu0 %v2083
        %2187 = vmatprep.subr.bf16.mxu0 0
        %2188 = vmatpush1.bf16.msra.mxu0 %v2084
        %2189 = vmatprep.subr.bf16.mxu0 0
        %2190 = vmatpush1.bf16.msra.mxu0 %v2085
        %2191 = vmatprep.mubr.bf16.mxu0 %v1854
        %2192 = vmatmul.mubr.bf16.gmra.mrb[0].mxu0 %v1853
        %v2193 = vpop.f32.mrb[0].mxu0
        %v2194 = vadd.f32 %v2153, %v2193
        %v2195 = vpop.f32.mrb[0].mxu0
        %v2196 = vpop.f32.mrb[0].mxu0
        %v2197 = vadd.f32 %v2156, %v2196
        %v2198 = vpop.f32.mrb[0].mxu0
        %2199 = vdwg.mxu0
        %v2200 = vadd.f32 %v1444, %v2194
        %v2201 = vadd.f32 %v1445, %v2197
        %2202 = vst [vmem:[%s516] sm:$0xff] %v2200
        %2203 = vst [vmem:[%s516 + $0x8] sm:$0xff] %v2201
        %s2204 = sand.u32 %s318, 1
        %s2205 = scalar_lea.sflag [#allocation5], %s2204
        %s2206 = sand.u32 %s318, 1
        %s2207 = smul.addr %s2206, 16
        %s2208 = scalar_lea.vmem [#allocation12], %s2207
        // Predicated region
        $region93: #{tpu_custom_call.1} parent=71 // pred_check
          %p2209 = pneg %p328
        $region94: #{tpu_custom_call.1} parent=71 // pred_check_branch
          %2211 = sbr.rel (%p2209) target = $region96
        $region95: #{tpu_custom_call.1} parent=71 // pred_region
          %s2213 = ssub.s32 256, 256
          %2214 = vsyncadd %s2205, %s2213
          %s2215 = smul.addr %s32, 2
          %s2216 = smul.addr %s2215, 128
          %s2217 = scalar_lea.hbm %s13, %s2216
          %s2218 = sshll.u32 %s2208, 4
          %s2219 = int_to_ptr.vmem [resolvable:$true] %s2218
          %2224 = dma.vmem_to_hbm [thread:$0]  %s2219, 256, %s2217, %s2205, 128, 128, 8
        $region96: #{tpu_custom_call.1} parent=71 // pred_fallthru
          _
      $region72: #{tpu_custom_call.1} parent=5 // pred_fallthru
        _
      %p2225 = scmp.le.s32.totalorder 2, %s27
      // Predicated region
      $region97: #{tpu_custom_call.1} parent=5 // pred_check
        %p2226 = pneg %p2225
      $region98: #{tpu_custom_call.1} parent=5 // pred_check_branch
        %2228 = sbr.rel (%p2226) target = $region100
      $region99: #{tpu_custom_call.1} parent=5 // pred_region
        %s2229 = ssub.s32 %s27, 2
        // Predicated region
        $region101: #{tpu_custom_call.1} parent=99 // pred_check
          %p2230 = pneg %p334
        $region102: #{tpu_custom_call.1} parent=99 // pred_check_branch
          %2232 = sbr.rel (%p2230) target = $region104
        $region103: #{tpu_custom_call.1} parent=99 // pred_region
          %s2233 = sand.u32 %s319, 1
          %s2234 = scalar_lea.sflag [#allocation5], %s2233
          %s2235 = sand.u32 %s319, 1
          %s2236 = smul.addr %s2235, 16
          %s2237 = scalar_lea.vmem [#allocation12], %s2236
          %2238 = dma.done %s2234, 256
        $region104: #{tpu_custom_call.1} parent=99 // pred_fallthru
          _
      $region100: #{tpu_custom_call.1} parent=5 // pred_fallthru
        _
    $region6: #{tpu_custom_call.1} parent=1 // loop_footer
      %s31 = sadd.s32 1, %s27
    $region7: #{tpu_custom_call.1} parent=1 // loop_footer_branch
      %26 = sbr.rel target = $region3
    $region8: #{tpu_custom_call.1} parent=1 // loop_exit
      _
    %2239 = vsyncpa [#allocation4], 1
    %s2240 = scalar_lea.sflag [#allocation4], 1
    %2241 = vsyncpa %s2240, 1
    %2242 = vsyncpa [#allocation7], 1
    %2243 = vsyncpa [#allocation10], 1
    %2244 = vsyncpa [#allocation5], 1
    %s2245 = scalar_lea.sflag [#allocation5], 1
    %2246 = vsyncpa %s2245, 1

</llo_original>
